<compile_context>
chip_gen: v7x
topology: tpu7x:2x2x1
jax: 0.10.0
libtpu: 0.0.40
codegen_flags: <defaults>
</compile_context>

<pallas_src>
import functools

import numpy as np
import jax
import jax.numpy as jnp
from jax import lax
from jax.experimental import pallas as pl
from jax.experimental.pallas import tpu as pltpu

# --- Machine constants (from Machine.__init__) ---------------------------
N_OPS = 11
STOP_INDEX = 0
READ_INDEX = 8
WRITE_INDEX = 9
JUMP_INDEX = 10


# --------------------------------------------------------------------------
# Deterministic construction of the op-output tables (register_buffer
# `outputs` of shape (N, M, M, M)).  T[i, a1, a2, out] is the probability of
# output value `out` when op i runs with integer args a1, a2.
# Standard ANC semantics: ZERO->0, INC->(a+1)%M, ADD->(a+b)%M, SUB->(a-b)%M,
# DEC->(a-1)%M, MIN, MAX.  READ/WRITE/JUMP contribute no table output; STOP
# outputs 0.
# TODO(synk): exact ANC Ops.py tables for STOP/READ/WRITE/JUMP assumed
# (delta-at-0 for STOP, all-zeros for READ/WRITE/JUMP).
# --------------------------------------------------------------------------
def build_op_tables(M):
    idx = np.arange(M)
    a1 = idx[:, None]
    a2 = idx[None, :]

    def onehot(vals):
        vals = np.broadcast_to(vals, (M, M))
        return (vals[..., None] == idx[None, None, :]).astype(np.float32)

    T = np.zeros((N_OPS, M, M, M), dtype=np.float32)
    zero = np.zeros((M, M), dtype=np.int64)
    T[0] = onehot(zero)                      # Stop
    T[1] = onehot(zero)                      # Zero
    T[2] = onehot((a1 + 1) % M)              # Increment
    T[3] = onehot((a1 + a2) % M)             # Add
    T[4] = onehot((a1 - a2) % M)             # Subtract
    T[5] = onehot((a1 - 1) % M)              # Decrement
    T[6] = onehot(np.minimum(a1, a2))        # Min
    T[7] = onehot(np.maximum(a1, a2))        # Max
    # T[8] (Read), T[9] (Write), T[10] (Jump): zeros
    return T


def build_constants(M):
    """Constant matrices consumed by the kernel (parameter setup / glue)."""
    N = N_OPS
    T4 = build_op_tables(M)                                      # (N, M, M, M)

    # Lane-dense op table:  T_r[(i*M + a2), (m*M + a1)] = T4[i, a1, a2, m]
    T_r = np.ascontiguousarray(
        np.transpose(T4, (0, 2, 3, 1)).reshape(N * M, M * M))    # (N*M, M*M)

    # Tiny 0/1 selection matrices (all <=256 lanes wide):
    #   (e    @ RepE  )[i*M + a2] = e[i]
    #   (arg2 @ TileA2)[i*M + a2] = arg2[a2]
    #   (arg1 @ TileA1)[m*M + a1] = arg1[a1]
    #   (x    @ KM    )[m']       = sum_{a1} x[m'*M + a1]
    RepE = np.kron(np.eye(N, dtype=np.float32),
                   np.ones((1, M), dtype=np.float32))            # (N,   N*M)
    TileA2 = np.tile(np.eye(M, dtype=np.float32), (1, N))        # (M,   N*M)
    TileA1 = np.tile(np.eye(M, dtype=np.float32), (1, M))        # (M,   M*M)
    KM = np.kron(np.eye(M, dtype=np.float32),
                 np.ones((M, 1), dtype=np.float32))              # (M*M, M)

    # Shift matrix S so that (IR @ S)[k] = IR[(k-1) % M]  (cat([IR[-1], IR[:-1]]))
    S = np.zeros((M, M), dtype=np.float32)
    for j in range(M):
        S[j, (j + 1) % M] = 1.0

    return (jnp.asarray(T4), jnp.asarray(T_r), jnp.asarray(RepE),
            jnp.asarray(TileA2), jnp.asarray(TileA1), jnp.asarray(KM),
            jnp.asarray(S))


# --------------------------------------------------------------------------
# In-kernel helpers
# --------------------------------------------------------------------------
def _row_to_col(row, n):
    """(1, n) -> (n, 1) without a transpose: mask with an iota identity and
    reduce along lanes (VPU multiply + XLU reduce)."""
    r_ids = lax.broadcasted_iota(jnp.int32, (n, n), 0)
    c_ids = lax.broadcasted_iota(jnp.int32, (n, n), 1)
    eye = jnp.where(r_ids == c_ids, 1.0, 0.0).astype(jnp.float32)
    return jnp.sum(row * eye, axis=1, keepdims=True)


# --------------------------------------------------------------------------
# Pallas kernel: T fused Machine timesteps (grid=(T,), sequential recurrence).
# --------------------------------------------------------------------------
def machine_kernel(M, R,
                   e_seq_ref, a_seq_ref, b_seq_ref, o_seq_ref,
                   mem0_ref, reg0_ref, ir0_ref,
                   repe_ref, tila2_ref, tila1_ref, tbl_ref, km_ref, shift_ref,
                   mem_out_ref, reg_out_ref, ir_out_ref, stop_out_ref,
                   mem_s, reg_s, ir_s):
    f32 = jnp.float32
    t = pl.program_id(0)
    n_steps = pl.num_programs(0)

    # -- init VMEM-resident state at the first timestep ---------------------
    @pl.when(t == 0)
    def _():
        mem_s[...] = mem0_ref[...]
        reg_s[...] = reg0_ref[...]
        ir_s[...] = ir0_ref[...]

    # -- current-step controller outputs (resident trace, dynamic row) ------
    e = e_seq_ref[pl.ds(t, 1), :]          # (1, N)
    a = a_seq_ref[pl.ds(t, 1), :]          # (1, R)
    b = b_seq_ref[pl.ds(t, 1), :]          # (1, R)
    o = o_seq_ref[pl.ds(t, 1), :]          # (1, R)

    mem = mem_s[...]                       # (M, M)
    reg = reg_s[...]                       # (R, M)
    ir = ir_s[...]                         # (1, M)

    arg1 = jnp.dot(a, reg, preferred_element_type=f32)      # (1, M)
    arg2 = jnp.dot(b, reg, preferred_element_type=f32)      # (1, M)

    # -- out_vec: sum_{i,a1,a2} T4[i,a1,a2,:] * e[i]*arg1[a1]*arg2[a2] -------
    # flat[m*M + a1] = sum_{i,a2} e[i]*arg2[a2]*T4[i,a1,a2,m]   (lane-dense)
    ew = jnp.dot(e, repe_ref[...], preferred_element_type=f32)       # (1, N*M)
    a2w = jnp.dot(arg2, tila2_ref[...], preferred_element_type=f32)  # (1, N*M)
    flat = jnp.dot(ew * a2w, tbl_ref[...],
                   preferred_element_type=f32)                       # (1, M*M)
    a1w = jnp.dot(arg1, tila1_ref[...], preferred_element_type=f32)  # (1, M*M)
    out_core = jnp.dot(flat * a1w, km_ref[...],
                       preferred_element_type=f32)                   # (1, M)

    read_p = e[:, READ_INDEX:READ_INDEX + 1]                         # (1, 1)
    out_vec = out_core + read_p * jnp.dot(arg1, mem,
                                          preferred_element_type=f32)

    # -- column forms derived in-kernel (no host-side transposed inputs) ----
    arg1_col = _row_to_col(arg1, M)        # (M, 1)
    o_col = _row_to_col(o, R)              # (R, 1)

    # -- writeMemory ---------------------------------------------------------
    wp = e[:, WRITE_INDEX:WRITE_INDEX + 1]                           # (1, 1)
    mem_write = (jnp.dot(arg1_col, arg2, preferred_element_type=f32)
                 + (1.0 - arg1_col) * mem)                           # (M, M)
    new_mem = mem * (1.0 - wp) + wp * mem_write

    # -- writeRegisters ------------------------------------------------------
    new_reg = ((1.0 - o_col) * reg
               + jnp.dot(o_col, out_vec, preferred_element_type=f32))

    # -- updateIR ------------------------------------------------------------
    cond = e[:, JUMP_INDEX:JUMP_INDEX + 1] * arg1[:, 0:1]            # (1, 1)
    ir_shift = jnp.dot(ir, shift_ref[...], preferred_element_type=f32)
    new_ir = ir_shift * (1.0 - cond) + arg2 * cond

    # -- carry state in VMEM scratch ----------------------------------------
    mem_s[...] = new_mem
    reg_s[...] = new_reg
    ir_s[...] = new_ir

    # -- getStop (last write wins; written back to HBM once at the end) -----
    stop_out_ref[...] = e[:, STOP_INDEX:STOP_INDEX + 1]

    # -- single HBM writeback of the final state -----------------------------
    @pl.when(t == n_steps - 1)
    def _():
        mem_out_ref[...] = new_mem
        reg_out_ref[...] = new_reg
        ir_out_ref[...] = new_ir


# --------------------------------------------------------------------------
# Wrappers
# --------------------------------------------------------------------------
def machine_rollout(e_seq, a_seq, b_seq, o_seq, memory, registers, IR, consts):
    """Run T fused Machine timesteps inside one pallas_call.

    e_seq:(T,N)  a_seq/b_seq/o_seq:(T,R)  memory:(M,M)  registers:(R,M)  IR:(M,)
    Returns (memory, registers, IR, stops(T,), last_stop()).
    """
    _, T_r, RepE, TileA2, TileA1, KM, S = consts
    M = memory.shape[0]
    R = registers.shape[0]
    T = e_seq.shape[0]
    f32 = jnp.float32

    e_seq = e_seq.reshape(T, N_OPS).astype(f32)
    a_seq = a_seq.reshape(T, R).astype(f32)
    b_seq = b_seq.reshape(T, R).astype(f32)
    o_seq = o_seq.reshape(T, R).astype(f32)
    mem0 = memory.astype(f32)
    reg0 = registers.astype(f32)
    ir0 = IR.reshape(1, M).astype(f32)

    def full(shape):
        # Whole-array block, VMEM-resident across the entire (T,) grid.
        return pl.BlockSpec(shape, lambda t, s=shape: (0,) * len(s))

    kernel = functools.partial(machine_kernel, M, R)

    grid_spec = pltpu.PrefetchScalarGridSpec(
        num_scalar_prefetch=0,
        grid=(T,),
        in_specs=[
            full((T, N_OPS)),        # e trace
            full((T, R)),            # a trace
            full((T, R)),            # b trace
            full((T, R)),            # o trace
            full((M, M)),            # initial memory
            full((R, M)),            # initial registers
            full((1, M)),            # initial IR
            full(tuple(RepE.shape)),     # (N,   N*M)
            full(tuple(TileA2.shape)),   # (M,   N*M)
            full(tuple(TileA1.shape)),   # (M,   M*M)
            full(tuple(T_r.shape)),      # (N*M, M*M)  lane-dense op table
            full(tuple(KM.shape)),       # (M*M, M)
            full(tuple(S.shape)),        # (M, M) IR shift
        ],
        out_specs=(
            full((M, M)),
            full((R, M)),
            full((1, M)),
            full((1, 1)),
        ),
        scratch_shapes=[
            pltpu.VMEM((M, M), f32),
            pltpu.VMEM((R, M), f32),
            pltpu.VMEM((1, M), f32),
        ],
    )

    new_mem, new_reg, new_ir, stop_last = pl.pallas_call(
        kernel,
        grid_spec=grid_spec,
        out_shape=(
            jax.ShapeDtypeStruct((M, M), f32),
            jax.ShapeDtypeStruct((R, M), f32),
            jax.ShapeDtypeStruct((1, M), f32),
            jax.ShapeDtypeStruct((1, 1), f32),
        ),
        compiler_params=pltpu.CompilerParams(
            dimension_semantics=("arbitrary",)),
    )(e_seq, a_seq, b_seq, o_seq, mem0, reg0, ir0,
      RepE, TileA2, TileA1, T_r, KM, S)

    # Per-step stop probabilities (== e_seq[:, STOP_INDEX], the module's
    # getStop per step); the kernel also returns the final step's stop.
    stops = e_seq[:, STOP_INDEX]
    return new_mem, new_reg, new_ir.reshape(M), stops, stop_last.reshape(())


def machine_forward(e, a, b, o, memory, registers, IR, consts):
    """Single Machine.forward timestep (T=1 rollout); PyTorch shapes:
       e:(N,), a/b/o:(R,), memory:(M,M), registers:(R,M), IR:(M,)."""
    new_mem, new_reg, new_ir, _stops, stop = machine_rollout(
        e.reshape(1, -1), a.reshape(1, -1), b.reshape(1, -1), o.reshape(1, -1),
        memory, registers, IR, consts)
    return new_mem, new_reg, new_ir, stop


# --------------------------------------------------------------------------
# Pure-JAX reference (mirrors the PyTorch forward exactly).
# --------------------------------------------------------------------------
def machine_reference(e, a, b, o, memory, registers, IR, T4):
    arg1 = a @ registers
    arg2 = b @ registers
    read_vec = e[READ_INDEX] * (arg1 @ memory)
    out_vec = jnp.einsum('iacm,i,a,c->m', T4, e, arg1, arg2) + read_vec
    wp = e[WRITE_INDEX]
    mem_write = jnp.outer(arg1, arg2) + (1.0 - arg1)[:, None] * memory
    new_mem = memory * (1.0 - wp) + wp * mem_write
    new_reg = (1.0 - o)[:, None] * registers + jnp.outer(o, out_vec)
    cond = e[JUMP_INDEX] * arg1[0]
    new_ir = jnp.roll(IR, 1) * (1.0 - cond) + arg2 * cond
    return new_mem, new_reg, new_ir, e[STOP_INDEX]


if __name__ == "__main__":
    M, R, T = 16, 4, 8
    consts = build_constants(M)
    T4 = consts[0]

    key = jax.random.PRNGKey(0)
    ks = jax.random.split(key, 7)
    e_seq = jax.nn.softmax(jax.random.normal(ks[0], (T, N_OPS), jnp.float32), axis=-1)
    a_seq = jax.nn.softmax(jax.random.normal(ks[1], (T, R), jnp.float32), axis=-1)
    b_seq = jax.nn.softmax(jax.random.normal(ks[2], (T, R), jnp.float32), axis=-1)
    o_seq = jax.nn.softmax(jax.random.normal(ks[3], (T, R), jnp.float32), axis=-1)
    memory = jax.nn.softmax(jax.random.normal(ks[4], (M, M), jnp.float32), axis=-1)
    registers = jax.nn.softmax(jax.random.normal(ks[5], (R, M), jnp.float32), axis=-1)
    IR = jax.nn.softmax(jax.random.normal(ks[6], (M,), jnp.float32))

    # --- single timestep: exact Machine.forward semantics --------------------
    out1 = jax.block_until_ready(machine_forward(
        e_seq[0], a_seq[0], b_seq[0], o_seq[0], memory, registers, IR, consts))
    ref1 = machine_reference(
        e_seq[0], a_seq[0], b_seq[0], o_seq[0], memory, registers, IR, T4)
    for got, want in zip(out1, ref1):
        np.testing.assert_allclose(np.asarray(got), np.asarray(want),
                                   rtol=2e-4, atol=2e-5)

    # --- fused T-step rollout ------------------------------------------------
    got_mem, got_reg, got_ir, got_stops, got_last = jax.block_until_ready(
        machine_rollout(e_seq, a_seq, b_seq, o_seq, memory, registers, IR, consts))

    ref_mem, ref_reg, ref_ir = memory, registers, IR
    ref_stops = []
    for t in range(T):
        ref_mem, ref_reg, ref_ir, s = machine_reference(
            e_seq[t], a_seq[t], b_seq[t], o_seq[t], ref_mem, ref_reg, ref_ir, T4)
        ref_stops.append(s)
    ref_stops = jnp.stack(ref_stops)

    np.testing.assert_allclose(np.asarray(got_mem), np.asarray(ref_mem),
                               rtol=2e-4, atol=2e-5)
    np.testing.assert_allclose(np.asarray(got_reg), np.asarray(ref_reg),
                               rtol=2e-4, atol=2e-5)
    np.testing.assert_allclose(np.asarray(got_ir), np.asarray(ref_ir),
                               rtol=2e-4, atol=2e-5)
    np.testing.assert_allclose(np.asarray(got_stops), np.asarray(ref_stops),
                               rtol=2e-4, atol=2e-5)
    np.testing.assert_allclose(np.asarray(got_last), np.asarray(ref_stops[-1]),
                               rtol=2e-4, atol=2e-5)

    print("KERNEL_OK")
</pallas_src>

<mosaic_0001>
module attributes {stable_mosaic.version = 11 : i64} {
  func.func @machine_kernel(%arg0: i32, %arg1: memref<1x11xf32, #tpu.memory_space<vmem>>, %arg2: memref<1x4xf32, #tpu.memory_space<vmem>>, %arg3: memref<1x4xf32, #tpu.memory_space<vmem>>, %arg4: memref<1x4xf32, #tpu.memory_space<vmem>>, %arg5: memref<16x16xf32, #tpu.memory_space<vmem>>, %arg6: memref<4x16xf32, #tpu.memory_space<vmem>>, %arg7: memref<1x16xf32, #tpu.memory_space<vmem>>, %arg8: memref<11x176xf32, #tpu.memory_space<vmem>>, %arg9: memref<16x176xf32, #tpu.memory_space<vmem>>, %arg10: memref<16x256xf32, #tpu.memory_space<vmem>>, %arg11: memref<176x256xf32, #tpu.memory_space<vmem>>, %arg12: memref<256x16xf32, #tpu.memory_space<vmem>>, %arg13: memref<16x16xf32, #tpu.memory_space<vmem>>, %arg14: memref<16x16xf32, #tpu.memory_space<vmem>>, %arg15: memref<4x16xf32, #tpu.memory_space<vmem>>, %arg16: memref<1x16xf32, #tpu.memory_space<vmem>>, %arg17: memref<1x1xf32, #tpu.memory_space<vmem>>, %arg18: memref<16x16xf32, #tpu.memory_space<vmem>>, %arg19: memref<4x16xf32, #tpu.memory_space<vmem>>, %arg20: memref<1x16xf32, #tpu.memory_space<vmem>>) attributes {dimension_semantics = [#tpu.dimension_semantics<arbitrary>], iteration_bounds = array<i64: 1>, scalar_prefetch = 0 : i64, scratch_operands = 3 : i64, tpu.core_type = #tpu.core_type<tc>, window_params = [{pipeline_mode = #tpu.pipeline_mode<synchronous>, transform_indices = @transform_0, window_bounds = array<i64: 1, 11>}, {pipeline_mode = #tpu.pipeline_mode<synchronous>, transform_indices = @transform_1, window_bounds = array<i64: 1, 4>}, {pipeline_mode = #tpu.pipeline_mode<synchronous>, transform_indices = @transform_2, window_bounds = array<i64: 1, 4>}, {pipeline_mode = #tpu.pipeline_mode<synchronous>, transform_indices = @transform_3, window_bounds = array<i64: 1, 4>}, {pipeline_mode = #tpu.pipeline_mode<synchronous>, transform_indices = @transform_4, window_bounds = array<i64: 16, 16>}, {pipeline_mode = #tpu.pipeline_mode<synchronous>, transform_indices = @transform_5, window_bounds = array<i64: 4, 16>}, {pipeline_mode = #tpu.pipeline_mode<synchronous>, transform_indices = @transform_6, window_bounds = array<i64: 1, 16>}, {pipeline_mode = #tpu.pipeline_mode<synchronous>, transform_indices = @transform_7, window_bounds = array<i64: 11, 176>}, {pipeline_mode = #tpu.pipeline_mode<synchronous>, transform_indices = @transform_8, window_bounds = array<i64: 16, 176>}, {pipeline_mode = #tpu.pipeline_mode<synchronous>, transform_indices = @transform_9, window_bounds = array<i64: 16, 256>}, {pipeline_mode = #tpu.pipeline_mode<synchronous>, transform_indices = @transform_10, window_bounds = array<i64: 176, 256>}, {pipeline_mode = #tpu.pipeline_mode<synchronous>, transform_indices = @transform_11, window_bounds = array<i64: 256, 16>}, {pipeline_mode = #tpu.pipeline_mode<synchronous>, transform_indices = @transform_12, window_bounds = array<i64: 16, 16>}, {pipeline_mode = #tpu.pipeline_mode<synchronous>, transform_indices = @transform_13, window_bounds = array<i64: 16, 16>}, {pipeline_mode = #tpu.pipeline_mode<synchronous>, transform_indices = @transform_14, window_bounds = array<i64: 4, 16>}, {pipeline_mode = #tpu.pipeline_mode<synchronous>, transform_indices = @transform_15, window_bounds = array<i64: 1, 16>}, {pipeline_mode = #tpu.pipeline_mode<synchronous>, transform_indices = @transform_16, window_bounds = array<i64: 1, 1>}]} {
    %c0_i32 = arith.constant 0 : i32
    %0 = arith.cmpi eq, %arg0, %c0_i32 : i32
    %1 = arith.extui %0 : i1 to i32
    %c0_i32_0 = arith.constant 0 : i32
    %2 = arith.cmpi ne, %1, %c0_i32_0 : i32
    scf.if %2 {
      %c0_52 = arith.constant 0 : index
      %c0_53 = arith.constant 0 : index
      %93 = vector.load %arg5[%c0_52, %c0_53] : memref<16x16xf32, #tpu.memory_space<vmem>>, vector<16x16xf32>
      %c0_54 = arith.constant 0 : index
      %c0_55 = arith.constant 0 : index
      %94 = vector.load %arg18[%c0_54, %c0_55] : memref<16x16xf32, #tpu.memory_space<vmem>>, vector<16x16xf32>
      tpu.vector_store %arg18[%c0_54, %c0_55], %93 {strides = array<i32>} : memref<16x16xf32, #tpu.memory_space<vmem>>, vector<16x16xf32>,
      %c0_56 = arith.constant 0 : index
      %c0_57 = arith.constant 0 : index
      %95 = vector.load %arg6[%c0_56, %c0_57] : memref<4x16xf32, #tpu.memory_space<vmem>>, vector<4x16xf32>
      %c0_58 = arith.constant 0 : index
      %c0_59 = arith.constant 0 : index
      %96 = vector.load %arg19[%c0_58, %c0_59] : memref<4x16xf32, #tpu.memory_space<vmem>>, vector<4x16xf32>
      tpu.vector_store %arg19[%c0_58, %c0_59], %95 {strides = array<i32>} : memref<4x16xf32, #tpu.memory_space<vmem>>, vector<4x16xf32>,
      %c0_60 = arith.constant 0 : index
      %c0_61 = arith.constant 0 : index
      %97 = vector.load %arg7[%c0_60, %c0_61] : memref<1x16xf32, #tpu.memory_space<vmem>>, vector<1x16xf32>
      %c0_62 = arith.constant 0 : index
      %c0_63 = arith.constant 0 : index
      %98 = vector.load %arg20[%c0_62, %c0_63] : memref<1x16xf32, #tpu.memory_space<vmem>>, vector<1x16xf32>
      tpu.vector_store %arg20[%c0_62, %c0_63], %97 {strides = array<i32>} : memref<1x16xf32, #tpu.memory_space<vmem>>, vector<1x16xf32>,
    } else {
    }
    %3 = arith.index_cast %arg0 : i32 to index
    %c0 = arith.constant 0 : index
    %4 = vector.load %arg1[%3, %c0] : memref<1x11xf32, #tpu.memory_space<vmem>>, vector<1x11xf32>
    %5 = arith.index_cast %arg0 : i32 to index
    %c0_1 = arith.constant 0 : index
    %6 = vector.load %arg2[%5, %c0_1] : memref<1x4xf32, #tpu.memory_space<vmem>>, vector<1x4xf32>
    %7 = arith.index_cast %arg0 : i32 to index
    %c0_2 = arith.constant 0 : index
    %8 = vector.load %arg3[%7, %c0_2] : memref<1x4xf32, #tpu.memory_space<vmem>>, vector<1x4xf32>
    %9 = arith.index_cast %arg0 : i32 to index
    %c0_3 = arith.constant 0 : index
    %10 = vector.load %arg4[%9, %c0_3] : memref<1x4xf32, #tpu.memory_space<vmem>>, vector<1x4xf32>
    %c0_4 = arith.constant 0 : index
    %c0_5 = arith.constant 0 : index
    %11 = vector.load %arg18[%c0_4, %c0_5] : memref<16x16xf32, #tpu.memory_space<vmem>>, vector<16x16xf32>
    %c0_6 = arith.constant 0 : index
    %c0_7 = arith.constant 0 : index
    %12 = vector.load %arg19[%c0_6, %c0_7] : memref<4x16xf32, #tpu.memory_space<vmem>>, vector<4x16xf32>
    %c0_8 = arith.constant 0 : index
    %c0_9 = arith.constant 0 : index
    %13 = vector.load %arg20[%c0_8, %c0_9] : memref<1x16xf32, #tpu.memory_space<vmem>>, vector<1x16xf32>
    %cst = arith.constant dense<0.000000e+00> : vector<1x16xf32>
    %14 = tpu.matmul %6, %12, %cst {dimension_numbers = #tpu.dot_dimension_numbers<[1], [0], [0], [1], [0, 0, 1, 1], [], []>} : vector<1x4xf32>, vector<4x16xf32>, vector<1x16xf32> -> vector<1x16xf32>
    %cst_10 = arith.constant dense<0.000000e+00> : vector<1x16xf32>
    %15 = tpu.matmul %8, %12, %cst_10 {dimension_numbers = #tpu.dot_dimension_numbers<[1], [0], [0], [1], [0, 0, 1, 1], [], []>} : vector<1x4xf32>, vector<4x16xf32>, vector<1x16xf32> -> vector<1x16xf32>
    %c0_11 = arith.constant 0 : index
    %c0_12 = arith.constant 0 : index
    %16 = vector.load %arg8[%c0_11, %c0_12] : memref<11x176xf32, #tpu.memory_space<vmem>>, vector<11x176xf32>
    %cst_13 = arith.constant dense<0.000000e+00> : vector<1x176xf32>
    %17 = tpu.matmul %4, %16, %cst_13 {dimension_numbers = #tpu.dot_dimension_numbers<[1], [0], [0], [1], [0, 0, 1, 1], [], []>} : vector<1x11xf32>, vector<11x176xf32>, vector<1x176xf32> -> vector<1x176xf32>
    %c0_14 = arith.constant 0 : index
    %c0_15 = arith.constant 0 : index
    %18 = vector.load %arg9[%c0_14, %c0_15] : memref<16x176xf32, #tpu.memory_space<vmem>>, vector<16x176xf32>
    %cst_16 = arith.constant dense<0.000000e+00> : vector<1x176xf32>
    %19 = tpu.matmul %15, %18, %cst_16 {dimension_numbers = #tpu.dot_dimension_numbers<[1], [0], [0], [1], [0, 0, 1, 1], [], []>} : vector<1x16xf32>, vector<16x176xf32>, vector<1x176xf32> -> vector<1x176xf32>
    %20 = arith.mulf %17, %19 : vector<1x176xf32>
    %c0_17 = arith.constant 0 : index
    %c0_18 = arith.constant 0 : index
    %21 = vector.load %arg11[%c0_17, %c0_18] : memref<176x256xf32, #tpu.memory_space<vmem>>, vector<176x256xf32>
    %cst_19 = arith.constant dense<0.000000e+00> : vector<1x256xf32>
    %22 = tpu.matmul %20, %21, %cst_19 {dimension_numbers = #tpu.dot_dimension_numbers<[1], [0], [0], [1], [0, 0, 1, 1], [], []>} : vector<1x176xf32>, vector<176x256xf32>, vector<1x256xf32> -> vector<1x256xf32>
    %c0_20 = arith.constant 0 : index
    %c0_21 = arith.constant 0 : index
    %23 = vector.load %arg10[%c0_20, %c0_21] : memref<16x256xf32, #tpu.memory_space<vmem>>, vector<16x256xf32>
    %cst_22 = arith.constant dense<0.000000e+00> : vector<1x256xf32>
    %24 = tpu.matmul %14, %23, %cst_22 {dimension_numbers = #tpu.dot_dimension_numbers<[1], [0], [0], [1], [0, 0, 1, 1], [], []>} : vector<1x16xf32>, vector<16x256xf32>, vector<1x256xf32> -> vector<1x256xf32>
    %25 = arith.mulf %22, %24 : vector<1x256xf32>
    %c0_23 = arith.constant 0 : index
    %c0_24 = arith.constant 0 : index
    %26 = vector.load %arg12[%c0_23, %c0_24] : memref<256x16xf32, #tpu.memory_space<vmem>>, vector<256x16xf32>
    %cst_25 = arith.constant dense<0.000000e+00> : vector<1x16xf32>
    %27 = tpu.matmul %25, %26, %cst_25 {dimension_numbers = #tpu.dot_dimension_numbers<[1], [0], [0], [1], [0, 0, 1, 1], [], []>} : vector<1x256xf32>, vector<256x16xf32>, vector<1x16xf32> -> vector<1x16xf32>
    %28 = vector.extract_strided_slice %4 {offsets = [0, 8], sizes = [1, 1], strides = [1, 1]} : vector<1x11xf32> to vector<1x1xf32>
    %cst_26 = arith.constant dense<0.000000e+00> : vector<1x16xf32>
    %29 = tpu.matmul %14, %11, %cst_26 {dimension_numbers = #tpu.dot_dimension_numbers<[1], [0], [0], [1], [0, 0, 1, 1], [], []>} : vector<1x16xf32>, vector<16x16xf32>, vector<1x16xf32> -> vector<1x16xf32>
    %30 = vector.broadcast %28 : vector<1x1xf32> to vector<1x16xf32>
    %31 = arith.mulf %30, %29 : vector<1x16xf32>
    %32 = arith.addf %27, %31 : vector<1x16xf32>
    %33 = tpu.iota {dimensions = array<i32: 0>} : vector<16x16xi32>
    %34 = tpu.iota {dimensions = array<i32: 1>} : vector<16x16xi32>
    %35 = arith.cmpi eq, %33, %34 : vector<16x16xi32>
    %cst_27 = arith.constant 1.000000e+00 : f32
    %cst_28 = arith.constant 0.000000e+00 : f32
    %36 = vector.broadcast %cst_27 : f32 to vector<16x16xf32>
    %37 = vector.broadcast %cst_28 : f32 to vector<16x16xf32>
    %38 = arith.select %35, %36, %37 : vector<16x16xi1>, vector<16x16xf32>
    %39 = vector.broadcast %14 : vector<1x16xf32> to vector<16x16xf32>
    %40 = arith.mulf %39, %38 : vector<16x16xf32>
    %cst_29 = arith.constant dense<0.000000e+00> : vector<16xf32>
    %41 = vector.multi_reduction <add>, %40, %cst_29 [1] : vector<16x16xf32> to vector<16xf32>
    %42 = vector.shape_cast %41 : vector<16xf32> to vector<16x1xf32>
    %43 = tpu.iota {dimensions = array<i32: 0>} : vector<4x4xi32>
    %44 = tpu.iota {dimensions = array<i32: 1>} : vector<4x4xi32>
    %45 = arith.cmpi eq, %43, %44 : vector<4x4xi32>
    %cst_30 = arith.constant 1.000000e+00 : f32
    %cst_31 = arith.constant 0.000000e+00 : f32
    %46 = vector.broadcast %cst_30 : f32 to vector<4x4xf32>
    %47 = vector.broadcast %cst_31 : f32 to vector<4x4xf32>
    %48 = arith.select %45, %46, %47 : vector<4x4xi1>, vector<4x4xf32>
    %49 = vector.broadcast %10 : vector<1x4xf32> to vector<4x4xf32>
    %50 = arith.mulf %49, %48 : vector<4x4xf32>
    %cst_32 = arith.constant dense<0.000000e+00> : vector<4xf32>
    %51 = vector.multi_reduction <add>, %50, %cst_32 [1] : vector<4x4xf32> to vector<4xf32>
    %52 = vector.shape_cast %51 : vector<4xf32> to vector<4x1xf32>
    %53 = vector.extract_strided_slice %4 {offsets = [0, 9], sizes = [1, 1], strides = [1, 1]} : vector<1x11xf32> to vector<1x1xf32>
    %cst_33 = arith.constant dense<0.000000e+00> : vector<16x16xf32>
    %54 = tpu.matmul %42, %15, %cst_33 {dimension_numbers = #tpu.dot_dimension_numbers<[1], [0], [0], [1], [0, 0, 1, 1], [], []>} : vector<16x1xf32>, vector<1x16xf32>, vector<16x16xf32> -> vector<16x16xf32>
    %cst_34 = arith.constant 1.000000e+00 : f32
    %55 = vector.broadcast %cst_34 : f32 to vector<16x1xf32>
    %56 = arith.subf %55, %42 : vector<16x1xf32>
    %57 = vector.broadcast %56 : vector<16x1xf32> to vector<16x16xf32>
    %58 = arith.mulf %57, %11 : vector<16x16xf32>
    %59 = arith.addf %54, %58 : vector<16x16xf32>
    %cst_35 = arith.constant 1.000000e+00 : f32
    %60 = vector.broadcast %cst_35 : f32 to vector<1x1xf32>
    %61 = arith.subf %60, %53 : vector<1x1xf32>
    %62 = vector.broadcast %61 : vector<1x1xf32> to vector<16x16xf32>
    %63 = arith.mulf %11, %62 : vector<16x16xf32>
    %64 = vector.broadcast %53 : vector<1x1xf32> to vector<16x16xf32>
    %65 = arith.mulf %64, %59 : vector<16x16xf32>
    %66 = arith.addf %63, %65 : vector<16x16xf32>
    %cst_36 = arith.constant 1.000000e+00 : f32
    %67 = vector.broadcast %cst_36 : f32 to vector<4x1xf32>
    %68 = arith.subf %67, %52 : vector<4x1xf32>
    %69 = vector.broadcast %68 : vector<4x1xf32> to vector<4x16xf32>
    %70 = arith.mulf %69, %12 : vector<4x16xf32>
    %cst_37 = arith.constant dense<0.000000e+00> : vector<4x16xf32>
    %71 = tpu.matmul %52, %32, %cst_37 {dimension_numbers = #tpu.dot_dimension_numbers<[1], [0], [0], [1], [0, 0, 1, 1], [], []>} : vector<4x1xf32>, vector<1x16xf32>, vector<4x16xf32> -> vector<4x16xf32>
    %72 = arith.addf %70, %71 : vector<4x16xf32>
    %73 = vector.extract_strided_slice %4 {offsets = [0, 10], sizes = [1, 1], strides = [1, 1]} : vector<1x11xf32> to vector<1x1xf32>
    %74 = vector.extract_strided_slice %14 {offsets = [0, 0], sizes = [1, 1], strides = [1, 1]} : vector<1x16xf32> to vector<1x1xf32>
    %75 = arith.mulf %73, %74 : vector<1x1xf32>
    %c0_38 = arith.constant 0 : index
    %c0_39 = arith.constant 0 : index
    %76 = vector.load %arg13[%c0_38, %c0_39] : memref<16x16xf32, #tpu.memory_space<vmem>>, vector<16x16xf32>
    %cst_40 = arith.constant dense<0.000000e+00> : vector<1x16xf32>
    %77 = tpu.matmul %13, %76, %cst_40 {dimension_numbers = #tpu.dot_dimension_numbers<[1], [0], [0], [1], [0, 0, 1, 1], [], []>} : vector<1x16xf32>, vector<16x16xf32>, vector<1x16xf32> -> vector<1x16xf32>
    %cst_41 = arith.constant 1.000000e+00 : f32
    %78 = vector.broadcast %cst_41 : f32 to vector<1x1xf32>
    %79 = arith.subf %78, %75 : vector<1x1xf32>
    %80 = vector.broadcast %79 : vector<1x1xf32> to vector<1x16xf32>
    %81 = arith.mulf %77, %80 : vector<1x16xf32>
    %82 = vector.broadcast %75 : vector<1x1xf32> to vector<1x16xf32>
    %83 = arith.mulf %15, %82 : vector<1x16xf32>
    %84 = arith.addf %81, %83 : vector<1x16xf32>
    %c0_42 = arith.constant 0 : index
    %c0_43 = arith.constant 0 : index
    %85 = vector.load %arg18[%c0_42, %c0_43] : memref<16x16xf32, #tpu.memory_space<vmem>>, vector<16x16xf32>
    tpu.vector_store %arg18[%c0_42, %c0_43], %66 {strides = array<i32>} : memref<16x16xf32, #tpu.memory_space<vmem>>, vector<16x16xf32>,
    %c0_44 = arith.constant 0 : index
    %c0_45 = arith.constant 0 : index
    %86 = vector.load %arg19[%c0_44, %c0_45] : memref<4x16xf32, #tpu.memory_space<vmem>>, vector<4x16xf32>
    tpu.vector_store %arg19[%c0_44, %c0_45], %72 {strides = array<i32>} : memref<4x16xf32, #tpu.memory_space<vmem>>, vector<4x16xf32>,
    %c0_46 = arith.constant 0 : index
    %c0_47 = arith.constant 0 : index
    %87 = vector.load %arg20[%c0_46, %c0_47] : memref<1x16xf32, #tpu.memory_space<vmem>>, vector<1x16xf32>
    tpu.vector_store %arg20[%c0_46, %c0_47], %84 {strides = array<i32>} : memref<1x16xf32, #tpu.memory_space<vmem>>, vector<1x16xf32>,
    %88 = vector.extract_strided_slice %4 {offsets = [0, 0], sizes = [1, 1], strides = [1, 1]} : vector<1x11xf32> to vector<1x1xf32>
    %c0_48 = arith.constant 0 : index
    %c0_49 = arith.constant 0 : index
    %89 = vector.load %arg17[%c0_48, %c0_49] : memref<1x1xf32, #tpu.memory_space<vmem>>, vector<1x1xf32>
    tpu.vector_store %arg17[%c0_48, %c0_49], %88 {strides = array<i32>} : memref<1x1xf32, #tpu.memory_space<vmem>>, vector<1x1xf32>,
    %c0_i32_50 = arith.constant 0 : i32
    %90 = arith.cmpi eq, %arg0, %c0_i32_50 : i32
    %91 = arith.extui %90 : i1 to i32
    %c0_i32_51 = arith.constant 0 : i32
    %92 = arith.cmpi ne, %91, %c0_i32_51 : i32
    scf.if %92 {
      %c0_52 = arith.constant 0 : index
      %c0_53 = arith.constant 0 : index
      %93 = vector.load %arg14[%c0_52, %c0_53] : memref<16x16xf32, #tpu.memory_space<vmem>>, vector<16x16xf32>
      tpu.vector_store %arg14[%c0_52, %c0_53], %66 {strides = array<i32>} : memref<16x16xf32, #tpu.memory_space<vmem>>, vector<16x16xf32>,
      %c0_54 = arith.constant 0 : index
      %c0_55 = arith.constant 0 : index
      %94 = vector.load %arg15[%c0_54, %c0_55] : memref<4x16xf32, #tpu.memory_space<vmem>>, vector<4x16xf32>
      tpu.vector_store %arg15[%c0_54, %c0_55], %72 {strides = array<i32>} : memref<4x16xf32, #tpu.memory_space<vmem>>, vector<4x16xf32>,
      %c0_56 = arith.constant 0 : index
      %c0_57 = arith.constant 0 : index
      %95 = vector.load %arg16[%c0_56, %c0_57] : memref<1x16xf32, #tpu.memory_space<vmem>>, vector<1x16xf32>
      tpu.vector_store %arg16[%c0_56, %c0_57], %84 {strides = array<i32>} : memref<1x16xf32, #tpu.memory_space<vmem>>, vector<1x16xf32>,
    } else {
    }
    return
  }
  func.func @transform_0(%arg0: i32) -> (i32, i32) {
    %c0_i32 = arith.constant 0 : i32
    %c0_i32_0 = arith.constant 0 : i32
    %c0_i32_1 = arith.constant 0 : i32
    return %c0_i32, %c0_i32_0 : i32, i32
  }
  func.func @transform_1(%arg0: i32) -> (i32, i32) {
    %c0_i32 = arith.constant 0 : i32
    %c0_i32_0 = arith.constant 0 : i32
    %c0_i32_1 = arith.constant 0 : i32
    return %c0_i32, %c0_i32_0 : i32, i32
  }
  func.func @transform_2(%arg0: i32) -> (i32, i32) {
    %c0_i32 = arith.constant 0 : i32
    %c0_i32_0 = arith.constant 0 : i32
    %c0_i32_1 = arith.constant 0 : i32
    return %c0_i32, %c0_i32_0 : i32, i32
  }
  func.func @transform_3(%arg0: i32) -> (i32, i32) {
    %c0_i32 = arith.constant 0 : i32
    %c0_i32_0 = arith.constant 0 : i32
    %c0_i32_1 = arith.constant 0 : i32
    return %c0_i32, %c0_i32_0 : i32, i32
  }
  func.func @transform_4(%arg0: i32) -> (i32, i32) {
    %c0_i32 = arith.constant 0 : i32
    %c0_i32_0 = arith.constant 0 : i32
    %c0_i32_1 = arith.constant 0 : i32
    return %c0_i32, %c0_i32_0 : i32, i32
  }
  func.func @transform_5(%arg0: i32) -> (i32, i32) {
    %c0_i32 = arith.constant 0 : i32
    %c0_i32_0 = arith.constant 0 : i32
    %c0_i32_1 = arith.constant 0 : i32
    return %c0_i32, %c0_i32_0 : i32, i32
  }
  func.func @transform_6(%arg0: i32) -> (i32, i32) {
    %c0_i32 = arith.constant 0 : i32
    %c0_i32_0 = arith.constant 0 : i32
    %c0_i32_1 = arith.constant 0 : i32
    return %c0_i32, %c0_i32_0 : i32, i32
  }
  func.func @transform_7(%arg0: i32) -> (i32, i32) {
    %c0_i32 = arith.constant 0 : i32
    %c0_i32_0 = arith.constant 0 : i32
    %c0_i32_1 = arith.constant 0 : i32
    return %c0_i32, %c0_i32_0 : i32, i32
  }
  func.func @transform_8(%arg0: i32) -> (i32, i32) {
    %c0_i32 = arith.constant 0 : i32
    %c0_i32_0 = arith.constant 0 : i32
    %c0_i32_1 = arith.constant 0 : i32
    return %c0_i32, %c0_i32_0 : i32, i32
  }
  func.func @transform_9(%arg0: i32) -> (i32, i32) {
    %c0_i32 = arith.constant 0 : i32
    %c0_i32_0 = arith.constant 0 : i32
    %c0_i32_1 = arith.constant 0 : i32
    return %c0_i32, %c0_i32_0 : i32, i32
  }
  func.func @transform_10(%arg0: i32) -> (i32, i32) {
    %c0_i32 = arith.constant 0 : i32
    %c0_i32_0 = arith.constant 0 : i32
    %c0_i32_1 = arith.constant 0 : i32
    return %c0_i32, %c0_i32_0 : i32, i32
  }
  func.func @transform_11(%arg0: i32) -> (i32, i32) {
    %c0_i32 = arith.constant 0 : i32
    %c0_i32_0 = arith.constant 0 : i32
    %c0_i32_1 = arith.constant 0 : i32
    return %c0_i32, %c0_i32_0 : i32, i32
  }
  func.func @transform_12(%arg0: i32) -> (i32, i32) {
    %c0_i32 = arith.constant 0 : i32
    %c0_i32_0 = arith.constant 0 : i32
    %c0_i32_1 = arith.constant 0 : i32
    return %c0_i32, %c0_i32_0 : i32, i32
  }
  func.func @transform_13(%arg0: i32) -> (i32, i32) {
    %c0_i32 = arith.constant 0 : i32
    %c0_i32_0 = arith.constant 0 : i32
    %c0_i32_1 = arith.constant 0 : i32
    return %c0_i32, %c0_i32_0 : i32, i32
  }
  func.func @transform_14(%arg0: i32) -> (i32, i32) {
    %c0_i32 = arith.constant 0 : i32
    %c0_i32_0 = arith.constant 0 : i32
    %c0_i32_1 = arith.constant 0 : i32
    return %c0_i32, %c0_i32_0 : i32, i32
  }
  func.func @transform_15(%arg0: i32) -> (i32, i32) {
    %c0_i32 = arith.constant 0 : i32
    %c0_i32_0 = arith.constant 0 : i32
    %c0_i32_1 = arith.constant 0 : i32
    return %c0_i32, %c0_i32_0 : i32, i32
  }
  func.func @transform_16(%arg0: i32) -> (i32, i32) {
    %c0_i32 = arith.constant 0 : i32
    %c0_i32_0 = arith.constant 0 : i32
    %c0_i32_1 = arith.constant 0 : i32
    return %c0_i32, %c0_i32_0 : i32, i32
  }
}

</mosaic_0001>

<llo_original>
// kernel: tpu_custom_call.1
$region0: #{tpu_custom_call.1}
  #allocation0 [shape = 'u32[]', space=smem, size = 0x4, offset = 0x4, fixed_abs, tag = 'smem constant byte address 0x4 - core index']
  #allocation1 [shape = 'u32[144,128]{1,0:T(1,128)}', space=vmem, size = 0x12000, scoped, tag = 'internal scratch']
  #allocation2 [shape = 'f32[16,16]{1,0:T(8,128)}', space=vmem, size = 0x2000, scoped, tag = 'scratch operand']
  #allocation3 [shape = 'f32[4,16]{1,0:T(4,128)}', space=vmem, size = 0x800, scoped, tag = 'scratch operand']
  #allocation4 [shape = 'f32[1,16]{1,0:T(1,128)}', space=vmem, size = 0x200, scoped, tag = 'scratch operand']
  %s0 = inlined_call_operand.vmem [shape: f32[1,11], index: 0, kind: input, shape index: {}]
  %s1 = inlined_call_operand.vmem [shape: f32[1,4], index: 1, kind: input, shape index: {}]
  %s2 = inlined_call_operand.vmem [shape: f32[1,4], index: 2, kind: input, shape index: {}]
  %s3 = inlined_call_operand.vmem [shape: f32[1,4], index: 3, kind: input, shape index: {}]
  %s4 = inlined_call_operand.vmem [shape: f32[16,16], index: 4, kind: input, shape index: {}]
  %s5 = inlined_call_operand.vmem [shape: f32[4,16], index: 5, kind: input, shape index: {}]
  %s6 = inlined_call_operand.vmem [shape: f32[1,16], index: 6, kind: input, shape index: {}]
  %s7 = inlined_call_operand.vmem [shape: f32[11,176], index: 7, kind: input, shape index: {}]
  %s8 = inlined_call_operand.vmem [shape: f32[16,176], index: 8, kind: input, shape index: {}]
  %s9 = inlined_call_operand.vmem [shape: f32[16,256], index: 9, kind: input, shape index: {}]
  %s10 = inlined_call_operand.hbm [shape: f32[176,256], index: 10, kind: input, shape index: {}]
  %s11 = inlined_call_operand.vmem [shape: f32[256,16], index: 11, kind: input, shape index: {}]
  %s12 = inlined_call_operand.vmem [shape: f32[16,16], index: 12, kind: input, shape index: {}]
  %s13 = inlined_call_operand.hbm [shape: f32[16,16], index: 13, kind: output, shape index: {0}]
  %s14 = inlined_call_operand.hbm [shape: f32[4,16], index: 14, kind: output, shape index: {1}]
  %s15 = inlined_call_operand.hbm [shape: f32[1,16], index: 15, kind: output, shape index: {2}]
  %s16 = inlined_call_operand.hbm [shape: f32[1,1], index: 16, kind: output, shape index: {3}]
  %17 = xla_tuple %s13, %s14, %s15, %s16
  %s18 = sld [smem:[#allocation0]]
  $region98: #{tpu_custom_call.1} parent=0
    _
  %s20 = ssub.s32 1, %s18
  %s21 = scalar_select 0, %s20, %s18
  $region1: #{tpu_custom_call.1} parent=0
    #allocation5 [shape = 'u8[180224]{0}', space=vmem, size = 0x2c000, scoped, tag = 'input window, operand 10, single buffered']
    #allocation6 [shape = 's32[1]{0}', space=sflag, size = 0x4, scoped, tag = 'scoped memory for tpu_custom_call.1']
    #allocation7 [shape = 's32[1]{0}', space=sflag, size = 0x4, scoped, tag = 'scoped memory for tpu_custom_call.1']
    #allocation8 [shape = 'u8[8192]{0}', space=vmem, size = 0x2000, scoped, tag = 'output window, operand 0, single buffered']
    #allocation9 [shape = 'u8[2048]{0}', space=vmem, size = 0x800, scoped, tag = 'output window, operand 1, single buffered']
    #allocation10 [shape = 's32[1]{0}', space=sflag, size = 0x4, scoped, tag = 'scoped memory for tpu_custom_call.1']
    #allocation11 [shape = 'u8[512]{0}', space=vmem, size = 0x400, scoped, tag = 'output window, operand 2, single buffered']
    #allocation12 [shape = 'u8[512]{0}', space=vmem, size = 0x400, scoped, tag = 'output window, operand 3, single buffered']
    #allocation13 [shape = 's32[1]{0}', space=sflag, size = 0x4, scoped, tag = 'scoped memory for tpu_custom_call.1']
    %22 = vsyncpa [#allocation6], 0
    %23 = vsyncpa [#allocation7], 0
    %24 = vsyncpa [#allocation10], 0
    %25 = vsyncpa [#allocation13], 0
    // Predicated region
    $region2: #{tpu_custom_call.1} parent=1 // pred_check
      _
    $region3: #{tpu_custom_call.1} parent=1 // pred_check_branch
      %27 = sbr.rel (0) target = $region5
    $region4: #{tpu_custom_call.1} parent=1 // pred_region
      _
    $region5: #{tpu_custom_call.1} parent=1 // pred_fallthru
      _
    // Predicated region
    $region6: #{tpu_custom_call.1} parent=1 // pred_check
      _
    $region7: #{tpu_custom_call.1} parent=1 // pred_check_branch
      %29 = sbr.rel (0) target = $region9
    $region8: #{tpu_custom_call.1} parent=1 // pred_region
      _
    $region9: #{tpu_custom_call.1} parent=1 // pred_fallthru
      _
    // Predicated region
    $region10: #{tpu_custom_call.1} parent=1 // pred_check
      _
    $region11: #{tpu_custom_call.1} parent=1 // pred_check_branch
      %31 = sbr.rel (0) target = $region13
    $region12: #{tpu_custom_call.1} parent=1 // pred_region
      _
    $region13: #{tpu_custom_call.1} parent=1 // pred_fallthru
      _
    // Predicated region
    $region14: #{tpu_custom_call.1} parent=1 // pred_check
      _
    $region15: #{tpu_custom_call.1} parent=1 // pred_check_branch
      %33 = sbr.rel (0) target = $region17
    $region16: #{tpu_custom_call.1} parent=1 // pred_region
      _
    $region17: #{tpu_custom_call.1} parent=1 // pred_fallthru
      _
    // Predicated region
    $region18: #{tpu_custom_call.1} parent=1 // pred_check
      _
    $region19: #{tpu_custom_call.1} parent=1 // pred_check_branch
      %35 = sbr.rel (0) target = $region21
    $region20: #{tpu_custom_call.1} parent=1 // pred_region
      _
    $region21: #{tpu_custom_call.1} parent=1 // pred_fallthru
      _
    // Predicated region
    $region22: #{tpu_custom_call.1} parent=1 // pred_check
      _
    $region23: #{tpu_custom_call.1} parent=1 // pred_check_branch
      %37 = sbr.rel (0) target = $region25
    $region24: #{tpu_custom_call.1} parent=1 // pred_region
      _
    $region25: #{tpu_custom_call.1} parent=1 // pred_fallthru
      _
    // Predicated region
    $region26: #{tpu_custom_call.1} parent=1 // pred_check
      _
    $region27: #{tpu_custom_call.1} parent=1 // pred_check_branch
      %39 = sbr.rel (0) target = $region29
    $region28: #{tpu_custom_call.1} parent=1 // pred_region
      _
    $region29: #{tpu_custom_call.1} parent=1 // pred_fallthru
      _
    // Predicated region
    $region30: #{tpu_custom_call.1} parent=1 // pred_check
      _
    $region31: #{tpu_custom_call.1} parent=1 // pred_check_branch
      %41 = sbr.rel (0) target = $region33
    $region32: #{tpu_custom_call.1} parent=1 // pred_region
      _
    $region33: #{tpu_custom_call.1} parent=1 // pred_fallthru
      _
    // Predicated region
    $region34: #{tpu_custom_call.1} parent=1 // pred_check
      _
    $region35: #{tpu_custom_call.1} parent=1 // pred_check_branch
      %43 = sbr.rel (0) target = $region37
    $region36: #{tpu_custom_call.1} parent=1 // pred_region
      _
    $region37: #{tpu_custom_call.1} parent=1 // pred_fallthru
      _
    // Predicated region
    $region38: #{tpu_custom_call.1} parent=1 // pred_check
      _
    $region39: #{tpu_custom_call.1} parent=1 // pred_check_branch
      %45 = sbr.rel (0) target = $region41
    $region40: #{tpu_custom_call.1} parent=1 // pred_region
      _
    $region41: #{tpu_custom_call.1} parent=1 // pred_fallthru
      _
    // Predicated region
    $region42: #{tpu_custom_call.1} parent=1 // pred_check
      _
    $region43: #{tpu_custom_call.1} parent=1 // pred_check_branch
      %47 = sbr.rel (0) target = $region45
    $region44: #{tpu_custom_call.1} parent=1 // pred_region
      %s49 = ssub.s32 5632, 5632
      %50 = vsyncadd [#allocation6], %s49
      %s51 = sshll.u32 [#allocation5], 4
      %s52 = int_to_ptr.vmem [resolvable:$true] %s51
      %57 = dma.hbm_to_vmem [thread:$0]  %s10, 5632, %s52, [#allocation6], 256, 256, 16
    $region45: #{tpu_custom_call.1} parent=1 // pred_fallthru
      _
    // Predicated region
    $region46: #{tpu_custom_call.1} parent=1 // pred_check
      _
    $region47: #{tpu_custom_call.1} parent=1 // pred_check_branch
      %59 = sbr.rel (0) target = $region49
    $region48: #{tpu_custom_call.1} parent=1 // pred_region
      _
    $region49: #{tpu_custom_call.1} parent=1 // pred_fallthru
      _
    // Predicated region
    $region50: #{tpu_custom_call.1} parent=1 // pred_check
      _
    $region51: #{tpu_custom_call.1} parent=1 // pred_check_branch
      %61 = sbr.rel (0) target = $region53
    $region52: #{tpu_custom_call.1} parent=1 // pred_region
      _
    $region53: #{tpu_custom_call.1} parent=1 // pred_fallthru
      _
    // Predicated region
    $region54: #{tpu_custom_call.1} parent=1 // pred_check
      _
    $region55: #{tpu_custom_call.1} parent=1 // pred_check_branch
      %63 = sbr.rel (0) target = $region57
    $region56: #{tpu_custom_call.1} parent=1 // pred_region
      %64 = dma.done [#allocation6], 5632
    $region57: #{tpu_custom_call.1} parent=1 // pred_fallthru
      _
    %p65 = scmp.eq.s32.totalorder 0, 0
    // Predicated region
    $region58: #{tpu_custom_call.1} parent=1 // pred_check
      %p66 = pneg %p65
    $region59: #{tpu_custom_call.1} parent=1 // pred_check_branch
      %68 = sbr.rel (%p66) target = $region61
    $region60: #{tpu_custom_call.1} parent=1 // pred_region
      %v69 = vld [vmem:[%s4] sm:$0xff]
      %v70 = vld [vmem:[%s4 + $0x8] sm:$0xff]
      %vm71 = vcmask 130048
      %72 = vst.msk [vmem:[#allocation2] sm:$0xff] %vm71, %v69
      %73 = vst.msk [vmem:[#allocation2 + $0x8] sm:$0xff] %vm71, %v70
      %v74 = vld [vmem:[%s5] sm:$0xf]
      %vm75 = vcmask 125952
      %76 = vst.msk [vmem:[#allocation3] sm:$0xf] %vm75, %v74
      %v77 = vld [vmem:[%s6] sm:$0x1]
      %vm78 = vcmask 122880
      %79 = vst.msk [vmem:[#allocation4] sm:$0x1] %vm78, %v77
    $region61: #{tpu_custom_call.1} parent=1 // pred_fallthru
      _
    %v80 = vld [vmem:[%s0] sm:$0x1]
    %v81 = vld [vmem:[%s1] sm:$0x1]
    %v82 = vld [vmem:[%s2] sm:$0x1]
    %v83 = vld [vmem:[%s3] sm:$0x1]
    %v84 = vld [vmem:[#allocation2] sm:$0xff]
    %v85 = vld [vmem:[#allocation2 + $0x8] sm:$0xff]
    %v86 = vld [vmem:[#allocation3] sm:$0xf]
    %v87 = vld [vmem:[#allocation4] sm:$0x1]
    %vm88 = vcmask 31744
    %v90 = vsel %vm88, %v81, 0
    %vm92 = vcmask 1043456
    %v94 = vsel %vm92, %v86, 0
    %96 = vmatprep.subr.mxu0 0.0
    %97 = vmatpush1.msra.mxu0 %v94
    %98 = vmatprep.subr.mxu0 0.0
    %99 = vmatpush1.msra.mxu0 0.0
    %100 = vmatprep.subr.mxu0 0.0
    %101 = vmatpush1.msra.mxu0 0.0
    %102 = vmatprep.subr.mxu0 0.0
    %103 = vmatpush1.msra.mxu0 0.0
    %104 = vmatprep.subr.mxu0 0.0
    %105 = vmatpush1.msra.mxu0 0.0
    %106 = vmatprep.subr.mxu0 0.0
    %107 = vmatpush1.msra.mxu0 0.0
    %108 = vmatprep.subr.mxu0 0.0
    %109 = vmatpush1.msra.mxu0 0.0
    %110 = vmatprep.subr.mxu0 0.0
    %111 = vmatpush1.msra.mxu0 0.0
    %112 = vmatprep.subr.mxu0 0.0
    %113 = vmatpush1.msra.mxu0 0.0
    %114 = vmatprep.subr.mxu0 0.0
    %115 = vmatpush1.msra.mxu0 0.0
    %116 = vmatprep.subr.mxu0 0.0
    %117 = vmatpush1.msra.mxu0 0.0
    %118 = vmatprep.subr.mxu0 0.0
    %119 = vmatpush1.msra.mxu0 0.0
    %120 = vmatprep.subr.mxu0 0.0
    %121 = vmatpush1.msra.mxu0 0.0
    %122 = vmatprep.subr.mxu0 0.0
    %123 = vmatpush1.msra.mxu0 0.0
    %124 = vmatprep.subr.mxu0 0.0
    %125 = vmatpush1.msra.mxu0 0.0
    %126 = vmatprep.subr.mxu0 0.0
    %127 = vmatpush1.msra.mxu0 0.0
    %128 = vmatprep.subr.mxu0 0.0
    %129 = vmatpush1.msra.mxu0 0.0
    %130 = vmatprep.subr.mxu0 0.0
    %131 = vmatpush1.msra.mxu0 0.0
    %132 = vmatprep.subr.mxu0 0.0
    %133 = vmatpush1.msra.mxu0 0.0
    %134 = vmatprep.subr.mxu0 0.0
    %135 = vmatpush1.msra.mxu0 0.0
    %136 = vmatprep.subr.mxu0 0.0
    %137 = vmatpush1.msra.mxu0 0.0
    %138 = vmatprep.subr.mxu0 0.0
    %139 = vmatpush1.msra.mxu0 0.0
    %140 = vmatprep.subr.mxu0 0.0
    %141 = vmatpush1.msra.mxu0 0.0
    %142 = vmatprep.subr.mxu0 0.0
    %143 = vmatpush1.msra.mxu0 0.0
    %144 = vmatprep.subr.mxu0 0.0
    %145 = vmatpush1.msra.mxu0 0.0
    %146 = vmatprep.subr.mxu0 0.0
    %147 = vmatpush1.msra.mxu0 0.0
    %148 = vmatprep.subr.mxu0 0.0
    %149 = vmatpush1.msra.mxu0 0.0
    %150 = vmatprep.subr.mxu0 0.0
    %151 = vmatpush1.msra.mxu0 0.0
    %152 = vmatprep.subr.mxu0 0.0
    %153 = vmatpush1.msra.mxu0 0.0
    %154 = vmatprep.subr.mxu0 0.0
    %155 = vmatpush1.msra.mxu0 0.0
    %156 = vmatprep.subr.mxu0 0.0
    %157 = vmatpush1.msra.mxu0 0.0
    %158 = vmatprep.subr.mxu0 0.0
    %159 = vmatpush1.msra.mxu0 0.0
    %160 = vmatprep.mubr.f32.mxu0 0.0
    %161 = vmatmul.mubr.f32.gmra.mrb[0].mxu0 %v90
    %v162 = vpop.f32.mrb[0].mxu0
    %v163 = vadd.f32 0.0, %v162
    %v164 = vpop.f32.mrb[0].mxu0
    %165 = vdwg.mxu0
    %v167 = vsel %vm88, %v82, 0
    %169 = vmatprep.subr.mxu0 0.0
    %170 = vmatpush1.msra.mxu0 %v94
    %171 = vmatprep.subr.mxu0 0.0
    %172 = vmatpush1.msra.mxu0 0.0
    %173 = vmatprep.subr.mxu0 0.0
    %174 = vmatpush1.msra.mxu0 0.0
    %175 = vmatprep.subr.mxu0 0.0
    %176 = vmatpush1.msra.mxu0 0.0
    %177 = vmatprep.subr.mxu0 0.0
    %178 = vmatpush1.msra.mxu0 0.0
    %179 = vmatprep.subr.mxu0 0.0
    %180 = vmatpush1.msra.mxu0 0.0
    %181 = vmatprep.subr.mxu0 0.0
    %182 = vmatpush1.msra.mxu0 0.0
    %183 = vmatprep.subr.mxu0 0.0
    %184 = vmatpush1.msra.mxu0 0.0
    %185 = vmatprep.subr.mxu0 0.0
    %186 = vmatpush1.msra.mxu0 0.0
    %187 = vmatprep.subr.mxu0 0.0
    %188 = vmatpush1.msra.mxu0 0.0
    %189 = vmatprep.subr.mxu0 0.0
    %190 = vmatpush1.msra.mxu0 0.0
    %191 = vmatprep.subr.mxu0 0.0
    %192 = vmatpush1.msra.mxu0 0.0
    %193 = vmatprep.subr.mxu0 0.0
    %194 = vmatpush1.msra.mxu0 0.0
    %195 = vmatprep.subr.mxu0 0.0
    %196 = vmatpush1.msra.mxu0 0.0
    %197 = vmatprep.subr.mxu0 0.0
    %198 = vmatpush1.msra.mxu0 0.0
    %199 = vmatprep.subr.mxu0 0.0
    %200 = vmatpush1.msra.mxu0 0.0
    %201 = vmatprep.subr.mxu0 0.0
    %202 = vmatpush1.msra.mxu0 0.0
    %203 = vmatprep.subr.mxu0 0.0
    %204 = vmatpush1.msra.mxu0 0.0
    %205 = vmatprep.subr.mxu0 0.0
    %206 = vmatpush1.msra.mxu0 0.0
    %207 = vmatprep.subr.mxu0 0.0
    %208 = vmatpush1.msra.mxu0 0.0
    %209 = vmatprep.subr.mxu0 0.0
    %210 = vmatpush1.msra.mxu0 0.0
    %211 = vmatprep.subr.mxu0 0.0
    %212 = vmatpush1.msra.mxu0 0.0
    %213 = vmatprep.subr.mxu0 0.0
    %214 = vmatpush1.msra.mxu0 0.0
    %215 = vmatprep.subr.mxu0 0.0
    %216 = vmatpush1.msra.mxu0 0.0
    %217 = vmatprep.subr.mxu0 0.0
    %218 = vmatpush1.msra.mxu0 0.0
    %219 = vmatprep.subr.mxu0 0.0
    %220 = vmatpush1.msra.mxu0 0.0
    %221 = vmatprep.subr.mxu0 0.0
    %222 = vmatpush1.msra.mxu0 0.0
    %223 = vmatprep.subr.mxu0 0.0
    %224 = vmatpush1.msra.mxu0 0.0
    %225 = vmatprep.subr.mxu0 0.0
    %226 = vmatpush1.msra.mxu0 0.0
    %227 = vmatprep.subr.mxu0 0.0
    %228 = vmatpush1.msra.mxu0 0.0
    %229 = vmatprep.subr.mxu0 0.0
    %230 = vmatpush1.msra.mxu0 0.0
    %231 = vmatprep.subr.mxu0 0.0
    %232 = vmatpush1.msra.mxu0 0.0
    %233 = vmatprep.mubr.f32.mxu0 0.0
    %234 = vmatmul.mubr.f32.gmra.mrb[0].mxu0 %v167
    %v235 = vpop.f32.mrb[0].mxu0
    %v236 = vadd.f32 0.0, %v235
    %v237 = vpop.f32.mrb[0].mxu0
    %238 = vdwg.mxu0
    %v239 = vld [vmem:[%s7] sm:$0xff]
    %v240 = vld [vmem:[%s7 + $0x8] sm:$0xff]
    %v241 = vld [vmem:[%s7 + $0x10] sm:$0x7]
    %v242 = vld [vmem:[%s7 + $0x18] sm:$0x7]
    %vm243 = vcmask 89088
    %v245 = vsel %vm243, %v80, 0
    %vm247 = vcmask 1042432
    %v249 = vsel %vm247, %v241, 0
    %v252 = vsel %vm247, %v242, 0
    %254 = vmatprep.subr.mxu0 %v240
    %255 = vmatpush1.msra.mxu0 %v239
    %256 = vmatprep.subr.mxu0 %v252
    %257 = vmatpush1.msra.mxu0 %v249
    %258 = vmatprep.subr.mxu0 0.0
    %259 = vmatpush1.msra.mxu0 0.0
    %260 = vmatprep.subr.mxu0 0.0
    %261 = vmatpush1.msra.mxu0 0.0
    %262 = vmatprep.subr.mxu0 0.0
    %263 = vmatpush1.msra.mxu0 0.0
    %264 = vmatprep.subr.mxu0 0.0
    %265 = vmatpush1.msra.mxu0 0.0
    %266 = vmatprep.subr.mxu0 0.0
    %267 = vmatpush1.msra.mxu0 0.0
    %268 = vmatprep.subr.mxu0 0.0
    %269 = vmatpush1.msra.mxu0 0.0
    %270 = vmatprep.subr.mxu0 0.0
    %271 = vmatpush1.msra.mxu0 0.0
    %272 = vmatprep.subr.mxu0 0.0
    %273 = vmatpush1.msra.mxu0 0.0
    %274 = vmatprep.subr.mxu0 0.0
    %275 = vmatpush1.msra.mxu0 0.0
    %276 = vmatprep.subr.mxu0 0.0
    %277 = vmatpush1.msra.mxu0 0.0
    %278 = vmatprep.subr.mxu0 0.0
    %279 = vmatpush1.msra.mxu0 0.0
    %280 = vmatprep.subr.mxu0 0.0
    %281 = vmatpush1.msra.mxu0 0.0
    %282 = vmatprep.subr.mxu0 0.0
    %283 = vmatpush1.msra.mxu0 0.0
    %284 = vmatprep.subr.mxu0 0.0
    %285 = vmatpush1.msra.mxu0 0.0
    %286 = vmatprep.subr.mxu0 0.0
    %287 = vmatpush1.msra.mxu0 0.0
    %288 = vmatprep.subr.mxu0 0.0
    %289 = vmatpush1.msra.mxu0 0.0
    %290 = vmatprep.subr.mxu0 0.0
    %291 = vmatpush1.msra.mxu0 0.0
    %292 = vmatprep.subr.mxu0 0.0
    %293 = vmatpush1.msra.mxu0 0.0
    %294 = vmatprep.subr.mxu0 0.0
    %295 = vmatpush1.msra.mxu0 0.0
    %296 = vmatprep.subr.mxu0 0.0
    %297 = vmatpush1.msra.mxu0 0.0
    %298 = vmatprep.subr.mxu0 0.0
    %299 = vmatpush1.msra.mxu0 0.0
    %300 = vmatprep.subr.mxu0 0.0
    %301 = vmatpush1.msra.mxu0 0.0
    %302 = vmatprep.subr.mxu0 0.0
    %303 = vmatpush1.msra.mxu0 0.0
    %304 = vmatprep.subr.mxu0 0.0
    %305 = vmatpush1.msra.mxu0 0.0
    %306 = vmatprep.subr.mxu0 0.0
    %307 = vmatpush1.msra.mxu0 0.0
    %308 = vmatprep.subr.mxu0 0.0
    %309 = vmatpush1.msra.mxu0 0.0
    %310 = vmatprep.subr.mxu0 0.0
    %311 = vmatpush1.msra.mxu0 0.0
    %312 = vmatprep.subr.mxu0 0.0
    %313 = vmatpush1.msra.mxu0 0.0
    %314 = vmatprep.subr.mxu0 0.0
    %315 = vmatpush1.msra.mxu0 0.0
    %316 = vmatprep.subr.mxu0 0.0
    %317 = vmatpush1.msra.mxu0 0.0
    %318 = vmatprep.mubr.f32.mxu0 0.0
    %319 = vmatmul.mubr.f32.gmra.mrb[0].mxu0 %v245
    %v320 = vpop.f32.mrb[0].mxu0
    %v321 = vadd.f32 0.0, %v320
    %v322 = vpop.f32.mrb[0].mxu0
    %v323 = vadd.f32 0.0, %v322
    %324 = vdwg.mxu0
    %v325 = vld [vmem:[%s8] sm:$0xff]
    %v326 = vld [vmem:[%s8 + $0x8] sm:$0xff]
    %v327 = vld [vmem:[%s8 + $0x10] sm:$0xff]
    %v328 = vld [vmem:[%s8 + $0x18] sm:$0xff]
    %vm329 = vcmask 130048
    %v331 = vsel %vm329, %v236, 0
    %333 = vmatprep.subr.mxu0 %v326
    %334 = vmatpush1.msra.mxu0 %v325
    %335 = vmatprep.subr.mxu0 %v328
    %336 = vmatpush1.msra.mxu0 %v327
    %337 = vmatprep.subr.mxu0 0.0
    %338 = vmatpush1.msra.mxu0 0.0
    %339 = vmatprep.subr.mxu0 0.0
    %340 = vmatpush1.msra.mxu0 0.0
    %341 = vmatprep.subr.mxu0 0.0
    %342 = vmatpush1.msra.mxu0 0.0
    %343 = vmatprep.subr.mxu0 0.0
    %344 = vmatpush1.msra.mxu0 0.0
    %345 = vmatprep.subr.mxu0 0.0
    %346 = vmatpush1.msra.mxu0 0.0
    %347 = vmatprep.subr.mxu0 0.0
    %348 = vmatpush1.msra.mxu0 0.0
    %349 = vmatprep.subr.mxu0 0.0
    %350 = vmatpush1.msra.mxu0 0.0
    %351 = vmatprep.subr.mxu0 0.0
    %352 = vmatpush1.msra.mxu0 0.0
    %353 = vmatprep.subr.mxu0 0.0
    %354 = vmatpush1.msra.mxu0 0.0
    %355 = vmatprep.subr.mxu0 0.0
    %356 = vmatpush1.msra.mxu0 0.0
    %357 = vmatprep.subr.mxu0 0.0
    %358 = vmatpush1.msra.mxu0 0.0
    %359 = vmatprep.subr.mxu0 0.0
    %360 = vmatpush1.msra.mxu0 0.0
    %361 = vmatprep.subr.mxu0 0.0
    %362 = vmatpush1.msra.mxu0 0.0
    %363 = vmatprep.subr.mxu0 0.0
    %364 = vmatpush1.msra.mxu0 0.0
    %365 = vmatprep.subr.mxu0 0.0
    %366 = vmatpush1.msra.mxu0 0.0
    %367 = vmatprep.subr.mxu0 0.0
    %368 = vmatpush1.msra.mxu0 0.0
    %369 = vmatprep.subr.mxu0 0.0
    %370 = vmatpush1.msra.mxu0 0.0
    %371 = vmatprep.subr.mxu0 0.0
    %372 = vmatpush1.msra.mxu0 0.0
    %373 = vmatprep.subr.mxu0 0.0
    %374 = vmatpush1.msra.mxu0 0.0
    %375 = vmatprep.subr.mxu0 0.0
    %376 = vmatpush1.msra.mxu0 0.0
    %377 = vmatprep.subr.mxu0 0.0
    %378 = vmatpush1.msra.mxu0 0.0
    %379 = vmatprep.subr.mxu0 0.0
    %380 = vmatpush1.msra.mxu0 0.0
    %381 = vmatprep.subr.mxu0 0.0
    %382 = vmatpush1.msra.mxu0 0.0
    %383 = vmatprep.subr.mxu0 0.0
    %384 = vmatpush1.msra.mxu0 0.0
    %385 = vmatprep.subr.mxu0 0.0
    %386 = vmatpush1.msra.mxu0 0.0
    %387 = vmatprep.subr.mxu0 0.0
    %388 = vmatpush1.msra.mxu0 0.0
    %389 = vmatprep.subr.mxu0 0.0
    %390 = vmatpush1.msra.mxu0 0.0
    %391 = vmatprep.subr.mxu0 0.0
    %392 = vmatpush1.msra.mxu0 0.0
    %393 = vmatprep.subr.mxu0 0.0
    %394 = vmatpush1.msra.mxu0 0.0
    %395 = vmatprep.subr.mxu0 0.0
    %396 = vmatpush1.msra.mxu0 0.0
    %397 = vmatprep.mubr.f32.mxu0 0.0
    %398 = vmatmul.mubr.f32.gmra.mrb[0].mxu0 %v331
    %v399 = vpop.f32.mrb[0].mxu0
    %v400 = vadd.f32 0.0, %v399
    %v401 = vpop.f32.mrb[0].mxu0
    %v402 = vadd.f32 0.0, %v401
    %403 = vdwg.mxu0
    %v404 = vmul.f32 %v321, %v400
    %v405 = vmul.f32 %v323, %v402
    %v406 = vld [vmem:[#allocation5] sm:$0xff]
    %v407 = vld [vmem:[#allocation5 + $0x8] sm:$0xff]
    %v408 = vld [vmem:[#allocation5 + $0x10] sm:$0xff]
    %v409 = vld [vmem:[#allocation5 + $0x18] sm:$0xff]
    %v410 = vld [vmem:[#allocation5 + $0x20] sm:$0xff]
    %v411 = vld [vmem:[#allocation5 + $0x28] sm:$0xff]
    %v412 = vld [vmem:[#allocation5 + $0x30] sm:$0xff]
    %v413 = vld [vmem:[#allocation5 + $0x38] sm:$0xff]
    %v414 = vld [vmem:[#allocation5 + $0x40] sm:$0xff]
    %v415 = vld [vmem:[#allocation5 + $0x48] sm:$0xff]
    %v416 = vld [vmem:[#allocation5 + $0x50] sm:$0xff]
    %v417 = vld [vmem:[#allocation5 + $0x58] sm:$0xff]
    %v418 = vld [vmem:[#allocation5 + $0x60] sm:$0xff]
    %v419 = vld [vmem:[#allocation5 + $0x68] sm:$0xff]
    %v420 = vld [vmem:[#allocation5 + $0x70] sm:$0xff]
    %v421 = vld [vmem:[#allocation5 + $0x78] sm:$0xff]
    %v422 = vld [vmem:[#allocation5 + $0x80] sm:$0xff]
    %v423 = vld [vmem:[#allocation5 + $0x88] sm:$0xff]
    %v424 = vld [vmem:[#allocation5 + $0x90] sm:$0xff]
    %v425 = vld [vmem:[#allocation5 + $0x98] sm:$0xff]
    %v426 = vld [vmem:[#allocation5 + $0xa0] sm:$0xff]
    %v427 = vld [vmem:[#allocation5 + $0xa8] sm:$0xff]
    %v428 = vld [vmem:[#allocation5 + $0xb0] sm:$0xff]
    %v429 = vld [vmem:[#allocation5 + $0xb8] sm:$0xff]
    %v430 = vld [vmem:[#allocation5 + $0xc0] sm:$0xff]
    %v431 = vld [vmem:[#allocation5 + $0xc8] sm:$0xff]
    %v432 = vld [vmem:[#allocation5 + $0xd0] sm:$0xff]
    %v433 = vld [vmem:[#allocation5 + $0xd8] sm:$0xff]
    %v434 = vld [vmem:[#allocation5 + $0xe0] sm:$0xff]
    %v435 = vld [vmem:[#allocation5 + $0xe8] sm:$0xff]
    %v436 = vld [vmem:[#allocation5 + $0xf0] sm:$0xff]
    %v437 = vld [vmem:[#allocation5 + $0xf8] sm:$0xff]
    %v438 = vld [vmem:[#allocation5 + $0x100] sm:$0xff]
    %v439 = vld [vmem:[#allocation5 + $0x108] sm:$0xff]
    %v440 = vld [vmem:[#allocation5 + $0x110] sm:$0xff]
    %v441 = vld [vmem:[#allocation5 + $0x118] sm:$0xff]
    %v442 = vld [vmem:[#allocation5 + $0x120] sm:$0xff]
    %v443 = vld [vmem:[#allocation5 + $0x128] sm:$0xff]
    %v444 = vld [vmem:[#allocation5 + $0x130] sm:$0xff]
    %v445 = vld [vmem:[#allocation5 + $0x138] sm:$0xff]
    %v446 = vld [vmem:[#allocation5 + $0x140] sm:$0xff]
    %v447 = vld [vmem:[#allocation5 + $0x148] sm:$0xff]
    %v448 = vld [vmem:[#allocation5 + $0x150] sm:$0xff]
    %v449 = vld [vmem:[#allocation5 + $0x158] sm:$0xff]
    %vm450 = vcmask 392192
    %v452 = vsel %vm450, %v405, 0
    %454 = vmatprep.subr.mxu0 %v407
    %455 = vmatpush1.msra.mxu0 %v406
    %456 = vmatprep.subr.mxu0 %v409
    %457 = vmatpush1.msra.mxu0 %v408
    %458 = vmatprep.subr.mxu0 %v411
    %459 = vmatpush1.msra.mxu0 %v410
    %460 = vmatprep.subr.mxu0 %v413
    %461 = vmatpush1.msra.mxu0 %v412
    %462 = vmatprep.subr.mxu0 %v415
    %463 = vmatpush1.msra.mxu0 %v414
    %464 = vmatprep.subr.mxu0 %v417
    %465 = vmatpush1.msra.mxu0 %v416
    %466 = vmatprep.subr.mxu0 %v419
    %467 = vmatpush1.msra.mxu0 %v418
    %468 = vmatprep.subr.mxu0 %v421
    %469 = vmatpush1.msra.mxu0 %v420
    %470 = vmatprep.subr.mxu0 %v423
    %471 = vmatpush1.msra.mxu0 %v422
    %472 = vmatprep.subr.mxu0 %v425
    %473 = vmatpush1.msra.mxu0 %v424
    %474 = vmatprep.subr.mxu0 %v427
    %475 = vmatpush1.msra.mxu0 %v426
    %476 = vmatprep.subr.mxu0 %v429
    %477 = vmatpush1.msra.mxu0 %v428
    %478 = vmatprep.subr.mxu0 %v431
    %479 = vmatpush1.msra.mxu0 %v430
    %480 = vmatprep.subr.mxu0 %v433
    %481 = vmatpush1.msra.mxu0 %v432
    %482 = vmatprep.subr.mxu0 %v435
    %483 = vmatpush1.msra.mxu0 %v434
    %484 = vmatprep.subr.mxu0 %v437
    %485 = vmatpush1.msra.mxu0 %v436
    %486 = vmatprep.subr.mxu0 %v439
    %487 = vmatpush1.msra.mxu0 %v438
    %488 = vmatprep.subr.mxu0 %v441
    %489 = vmatpush1.msra.mxu0 %v440
    %490 = vmatprep.subr.mxu0 %v443
    %491 = vmatpush1.msra.mxu0 %v442
    %492 = vmatprep.subr.mxu0 %v445
    %493 = vmatpush1.msra.mxu0 %v444
    %494 = vmatprep.subr.mxu0 %v447
    %495 = vmatpush1.msra.mxu0 %v446
    %496 = vmatprep.subr.mxu0 %v449
    %497 = vmatpush1.msra.mxu0 %v448
    %498 = vmatprep.subr.mxu0 0.0
    %499 = vmatpush1.msra.mxu0 0.0
    %500 = vmatprep.subr.mxu0 0.0
    %501 = vmatpush1.msra.mxu0 0.0
    %502 = vmatprep.subr.mxu0 0.0
    %503 = vmatpush1.msra.mxu0 0.0
    %504 = vmatprep.subr.mxu0 0.0
    %505 = vmatpush1.msra.mxu0 0.0
    %506 = vmatprep.subr.mxu0 0.0
    %507 = vmatpush1.msra.mxu0 0.0
    %508 = vmatprep.subr.mxu0 0.0
    %509 = vmatpush1.msra.mxu0 0.0
    %510 = vmatprep.subr.mxu0 0.0
    %511 = vmatpush1.msra.mxu0 0.0
    %512 = vmatprep.subr.mxu0 0.0
    %513 = vmatpush1.msra.mxu0 0.0
    %514 = vmatprep.subr.mxu0 0.0
    %515 = vmatpush1.msra.mxu0 0.0
    %516 = vmatprep.subr.mxu0 0.0
    %517 = vmatpush1.msra.mxu0 0.0
    %518 = vmatprep.mubr.f32.mxu0 %v452
    %519 = vmatmul.mubr.f32.gmra.mrb[0].mxu0 %v404
    %v520 = vpop.f32.mrb[0].mxu0
    %v521 = vadd.f32 0.0, %v520
    %v522 = vpop.f32.mrb[0].mxu0
    %v523 = vadd.f32 0.0, %v522
    %524 = vdwg.mxu0
    %v525 = vld [vmem:[%s9] sm:$0xff]
    %v526 = vld [vmem:[%s9 + $0x8] sm:$0xff]
    %v527 = vld [vmem:[%s9 + $0x10] sm:$0xff]
    %v528 = vld [vmem:[%s9 + $0x18] sm:$0xff]
    %v530 = vsel %vm329, %v163, 0
    %532 = vmatprep.subr.mxu0 %v526
    %533 = vmatpush1.msra.mxu0 %v525
    %534 = vmatprep.subr.mxu0 %v528
    %535 = vmatpush1.msra.mxu0 %v527
    %536 = vmatprep.subr.mxu0 0.0
    %537 = vmatpush1.msra.mxu0 0.0
    %538 = vmatprep.subr.mxu0 0.0
    %539 = vmatpush1.msra.mxu0 0.0
    %540 = vmatprep.subr.mxu0 0.0
    %541 = vmatpush1.msra.mxu0 0.0
    %542 = vmatprep.subr.mxu0 0.0
    %543 = vmatpush1.msra.mxu0 0.0
    %544 = vmatprep.subr.mxu0 0.0
    %545 = vmatpush1.msra.mxu0 0.0
    %546 = vmatprep.subr.mxu0 0.0
    %547 = vmatpush1.msra.mxu0 0.0
    %548 = vmatprep.subr.mxu0 0.0
    %549 = vmatpush1.msra.mxu0 0.0
    %550 = vmatprep.subr.mxu0 0.0
    %551 = vmatpush1.msra.mxu0 0.0
    %552 = vmatprep.subr.mxu0 0.0
    %553 = vmatpush1.msra.mxu0 0.0
    %554 = vmatprep.subr.mxu0 0.0
    %555 = vmatpush1.msra.mxu0 0.0
    %556 = vmatprep.subr.mxu0 0.0
    %557 = vmatpush1.msra.mxu0 0.0
    %558 = vmatprep.subr.mxu0 0.0
    %559 = vmatpush1.msra.mxu0 0.0
    %560 = vmatprep.subr.mxu0 0.0
    %561 = vmatpush1.msra.mxu0 0.0
    %562 = vmatprep.subr.mxu0 0.0
    %563 = vmatpush1.msra.mxu0 0.0
    %564 = vmatprep.subr.mxu0 0.0
    %565 = vmatpush1.msra.mxu0 0.0
    %566 = vmatprep.subr.mxu0 0.0
    %567 = vmatpush1.msra.mxu0 0.0
    %568 = vmatprep.subr.mxu0 0.0
    %569 = vmatpush1.msra.mxu0 0.0
    %570 = vmatprep.subr.mxu0 0.0
    %571 = vmatpush1.msra.mxu0 0.0
    %572 = vmatprep.subr.mxu0 0.0
    %573 = vmatpush1.msra.mxu0 0.0
    %574 = vmatprep.subr.mxu0 0.0
    %575 = vmatpush1.msra.mxu0 0.0
    %576 = vmatprep.subr.mxu0 0.0
    %577 = vmatpush1.msra.mxu0 0.0
    %578 = vmatprep.subr.mxu0 0.0
    %579 = vmatpush1.msra.mxu0 0.0
    %580 = vmatprep.subr.mxu0 0.0
    %581 = vmatpush1.msra.mxu0 0.0
    %582 = vmatprep.subr.mxu0 0.0
    %583 = vmatpush1.msra.mxu0 0.0
    %584 = vmatprep.subr.mxu0 0.0
    %585 = vmatpush1.msra.mxu0 0.0
    %586 = vmatprep.subr.mxu0 0.0
    %587 = vmatpush1.msra.mxu0 0.0
    %588 = vmatprep.subr.mxu0 0.0
    %589 = vmatpush1.msra.mxu0 0.0
    %590 = vmatprep.subr.mxu0 0.0
    %591 = vmatpush1.msra.mxu0 0.0
    %592 = vmatprep.subr.mxu0 0.0
    %593 = vmatpush1.msra.mxu0 0.0
    %594 = vmatprep.subr.mxu0 0.0
    %595 = vmatpush1.msra.mxu0 0.0
    %596 = vmatprep.mubr.f32.mxu0 0.0
    %597 = vmatmul.mubr.f32.gmra.mrb[0].mxu0 %v530
    %v598 = vpop.f32.mrb[0].mxu0
    %v599 = vadd.f32 0.0, %v598
    %v600 = vpop.f32.mrb[0].mxu0
    %v601 = vadd.f32 0.0, %v600
    %602 = vdwg.mxu0
    %v603 = vmul.f32 %v521, %v599
    %v604 = vmul.f32 %v523, %v601
    %v605 = vld [vmem:[%s11] sm:$0xff]
    %v606 = vld [vmem:[%s11 + $0x8] sm:$0xff]
    %v607 = vld [vmem:[%s11 + $0x10] sm:$0xff]
    %v608 = vld [vmem:[%s11 + $0x18] sm:$0xff]
    %v609 = vld [vmem:[%s11 + $0x20] sm:$0xff]
    %v610 = vld [vmem:[%s11 + $0x28] sm:$0xff]
    %v611 = vld [vmem:[%s11 + $0x30] sm:$0xff]
    %v612 = vld [vmem:[%s11 + $0x38] sm:$0xff]
    %v613 = vld [vmem:[%s11 + $0x40] sm:$0xff]
    %v614 = vld [vmem:[%s11 + $0x48] sm:$0xff]
    %v615 = vld [vmem:[%s11 + $0x50] sm:$0xff]
    %v616 = vld [vmem:[%s11 + $0x58] sm:$0xff]
    %v617 = vld [vmem:[%s11 + $0x60] sm:$0xff]
    %v618 = vld [vmem:[%s11 + $0x68] sm:$0xff]
    %v619 = vld [vmem:[%s11 + $0x70] sm:$0xff]
    %v620 = vld [vmem:[%s11 + $0x78] sm:$0xff]
    %v621 = vld [vmem:[%s11 + $0x80] sm:$0xff]
    %v622 = vld [vmem:[%s11 + $0x88] sm:$0xff]
    %v623 = vld [vmem:[%s11 + $0x90] sm:$0xff]
    %v624 = vld [vmem:[%s11 + $0x98] sm:$0xff]
    %v625 = vld [vmem:[%s11 + $0xa0] sm:$0xff]
    %v626 = vld [vmem:[%s11 + $0xa8] sm:$0xff]
    %v627 = vld [vmem:[%s11 + $0xb0] sm:$0xff]
    %v628 = vld [vmem:[%s11 + $0xb8] sm:$0xff]
    %v629 = vld [vmem:[%s11 + $0xc0] sm:$0xff]
    %v630 = vld [vmem:[%s11 + $0xc8] sm:$0xff]
    %v631 = vld [vmem:[%s11 + $0xd0] sm:$0xff]
    %v632 = vld [vmem:[%s11 + $0xd8] sm:$0xff]
    %v633 = vld [vmem:[%s11 + $0xe0] sm:$0xff]
    %v634 = vld [vmem:[%s11 + $0xe8] sm:$0xff]
    %v635 = vld [vmem:[%s11 + $0xf0] sm:$0xff]
    %v636 = vld [vmem:[%s11 + $0xf8] sm:$0xff]
    %637 = vmatprep.subr.mxu0 0.0
    %638 = vmatpush1.msra.mxu0 %v84
    %639 = vmatprep.subr.mxu0 0.0
    %640 = vmatpush1.msra.mxu0 %v85
    %641 = vmatprep.subr.mxu0 0.0
    %642 = vmatpush1.msra.mxu0 0.0
    %643 = vmatprep.subr.mxu0 0.0
    %644 = vmatpush1.msra.mxu0 0.0
    %645 = vmatprep.subr.mxu0 0.0
    %646 = vmatpush1.msra.mxu0 0.0
    %647 = vmatprep.subr.mxu0 0.0
    %648 = vmatpush1.msra.mxu0 0.0
    %649 = vmatprep.subr.mxu0 0.0
    %650 = vmatpush1.msra.mxu0 0.0
    %651 = vmatprep.subr.mxu0 0.0
    %652 = vmatpush1.msra.mxu0 0.0
    %653 = vmatprep.subr.mxu0 0.0
    %654 = vmatpush1.msra.mxu0 0.0
    %655 = vmatprep.subr.mxu0 0.0
    %656 = vmatpush1.msra.mxu0 0.0
    %657 = vmatprep.subr.mxu0 0.0
    %658 = vmatpush1.msra.mxu0 0.0
    %659 = vmatprep.subr.mxu0 0.0
    %660 = vmatpush1.msra.mxu0 0.0
    %661 = vmatprep.subr.mxu0 0.0
    %662 = vmatpush1.msra.mxu0 0.0
    %663 = vmatprep.subr.mxu0 0.0
    %664 = vmatpush1.msra.mxu0 0.0
    %665 = vmatprep.subr.mxu0 0.0
    %666 = vmatpush1.msra.mxu0 0.0
    %667 = vmatprep.subr.mxu0 0.0
    %668 = vmatpush1.msra.mxu0 0.0
    %669 = vmatprep.subr.mxu0 0.0
    %670 = vmatpush1.msra.mxu0 0.0
    %671 = vmatprep.subr.mxu0 0.0
    %672 = vmatpush1.msra.mxu0 0.0
    %673 = vmatprep.subr.mxu0 0.0
    %674 = vmatpush1.msra.mxu0 0.0
    %675 = vmatprep.subr.mxu0 0.0
    %676 = vmatpush1.msra.mxu0 0.0
    %677 = vmatprep.subr.mxu0 0.0
    %678 = vmatpush1.msra.mxu0 0.0
    %679 = vmatprep.subr.mxu0 0.0
    %680 = vmatpush1.msra.mxu0 0.0
    %681 = vmatprep.subr.mxu0 0.0
    %682 = vmatpush1.msra.mxu0 0.0
    %683 = vmatprep.subr.mxu0 0.0
    %684 = vmatpush1.msra.mxu0 0.0
    %685 = vmatprep.subr.mxu0 0.0
    %686 = vmatpush1.msra.mxu0 0.0
    %687 = vmatprep.subr.mxu0 0.0
    %688 = vmatpush1.msra.mxu0 0.0
    %689 = vmatprep.subr.mxu0 0.0
    %690 = vmatpush1.msra.mxu0 0.0
    %691 = vmatprep.subr.mxu0 0.0
    %692 = vmatpush1.msra.mxu0 0.0
    %693 = vmatprep.subr.mxu0 0.0
    %694 = vmatpush1.msra.mxu0 0.0
    %695 = vmatprep.subr.mxu0 0.0
    %696 = vmatpush1.msra.mxu0 0.0
    %697 = vmatprep.subr.mxu0 0.0
    %698 = vmatpush1.msra.mxu0 0.0
    %699 = vmatprep.subr.mxu0 0.0
    %700 = vmatpush1.msra.mxu0 0.0
    %701 = vmatprep.mubr.f32.mxu0 0.0
    %702 = vmatmul.mubr.f32.gmra.mrb[0].mxu0 %v530
    %v703 = vpop.f32.mrb[0].mxu0
    %v704 = vadd.f32 0.0, %v703
    %v705 = vpop.f32.mrb[0].mxu0
    %706 = vdwg.mxu0
    %707 = vset.pattern.permute.xlu0 8
    %708 = vperm.xlu0 %707, %v80
    %v709 = vpop.permute.xlu0 %708
    %v711 = vlaneseq
    %v712 = vshrl.u32 %v711, 7
    %v713 = vsub.s32 0, %v712
    %v714 = vrot.slane %v709, %v713
    %v715 = vmul.f32 %v714, %v704
    %716 = vmatprep.subr.mxu0 0.0
    %717 = vmatpush1.msra.mxu0 %v605
    %718 = vmatprep.subr.mxu0 0.0
    %719 = vmatpush1.msra.mxu0 %v606
    %720 = vmatprep.subr.mxu0 0.0
    %721 = vmatpush1.msra.mxu0 %v607
    %722 = vmatprep.subr.mxu0 0.0
    %723 = vmatpush1.msra.mxu0 %v608
    %724 = vmatprep.subr.mxu0 0.0
    %725 = vmatpush1.msra.mxu0 %v609
    %726 = vmatprep.subr.mxu0 0.0
    %727 = vmatpush1.msra.mxu0 %v610
    %728 = vmatprep.subr.mxu0 0.0
    %729 = vmatpush1.msra.mxu0 %v611
    %730 = vmatprep.subr.mxu0 0.0
    %731 = vmatpush1.msra.mxu0 %v612
    %732 = vmatprep.subr.mxu0 0.0
    %733 = vmatpush1.msra.mxu0 %v613
    %734 = vmatprep.subr.mxu0 0.0
    %735 = vmatpush1.msra.mxu0 %v614
    %736 = vmatprep.subr.mxu0 0.0
    %737 = vmatpush1.msra.mxu0 %v615
    %738 = vmatprep.subr.mxu0 0.0
    %739 = vmatpush1.msra.mxu0 %v616
    %740 = vmatprep.subr.mxu0 0.0
    %741 = vmatpush1.msra.mxu0 %v617
    %742 = vmatprep.subr.mxu0 0.0
    %743 = vmatpush1.msra.mxu0 %v618
    %744 = vmatprep.subr.mxu0 0.0
    %745 = vmatpush1.msra.mxu0 %v619
    %746 = vmatprep.subr.mxu0 0.0
    %747 = vmatpush1.msra.mxu0 %v620
    %748 = vmatprep.subr.mxu0 0.0
    %749 = vmatpush1.msra.mxu0 %v621
    %750 = vmatprep.subr.mxu0 0.0
    %751 = vmatpush1.msra.mxu0 %v622
    %752 = vmatprep.subr.mxu0 0.0
    %753 = vmatpush1.msra.mxu0 %v623
    %754 = vmatprep.subr.mxu0 0.0
    %755 = vmatpush1.msra.mxu0 %v624
    %756 = vmatprep.subr.mxu0 0.0
    %757 = vmatpush1.msra.mxu0 %v625
    %758 = vmatprep.subr.mxu0 0.0
    %759 = vmatpush1.msra.mxu0 %v626
    %760 = vmatprep.subr.mxu0 0.0
    %761 = vmatpush1.msra.mxu0 %v627
    %762 = vmatprep.subr.mxu0 0.0
    %763 = vmatpush1.msra.mxu0 %v628
    %764 = vmatprep.subr.mxu0 0.0
    %765 = vmatpush1.msra.mxu0 %v629
    %766 = vmatprep.subr.mxu0 0.0
    %767 = vmatpush1.msra.mxu0 %v630
    %768 = vmatprep.subr.mxu0 0.0
    %769 = vmatpush1.msra.mxu0 %v631
    %770 = vmatprep.subr.mxu0 0.0
    %771 = vmatpush1.msra.mxu0 %v632
    %772 = vmatprep.subr.mxu0 0.0
    %773 = vmatpush1.msra.mxu0 %v633
    %774 = vmatprep.subr.mxu0 0.0
    %775 = vmatpush1.msra.mxu0 %v634
    %776 = vmatprep.subr.mxu0 0.0
    %777 = vmatpush1.msra.mxu0 %v635
    %778 = vmatprep.subr.mxu0 0.0
    %779 = vmatpush1.msra.mxu0 %v636
    %780 = vmatprep.mubr.f32.mxu0 %v604
    %781 = vmatmul.mubr.f32.gmra.mrb[0].mxu0 %v603
    %v782 = vpop.f32.mrb[0].mxu0
    %v783 = vadd.f32 %v715, %v782
    %v784 = vpop.f32.mrb[0].mxu0
    %785 = vdwg.mxu0
    %v786 = vlaneseq
    %v787 = vshrl.u32 %v786, 7
    %v788 = vadd.s32 %v787, 8
    %v789 = vlaneseq
    %v790 = vand.u32 %v789, 127
    %vm791 = vcmp.eq.s32.totalorder %v787, %v790
    %vm792 = vcmp.eq.s32.totalorder %v788, %v790
    %v793 = vsel %vm791, 1.0, 0.0
    %v794 = vsel %vm792, 1.0, 0.0
    %v795 = vlaneseq
    %v796 = vshrl.u32 %v795, 7
    %v797 = vsub.s32 0, %v796
    %v798 = vrot.slane %v163, %v797
    %v799 = vmul.f32 %v798, %v793
    %v800 = vmul.f32 %v798, %v794
    %v801 = vsel %vm329, %v799, 0.0
    %802 = vadd.xlane.f32.xlu0 %v801
    %v803 = vpop.xlane.xlu0 %802
    %v804 = vsel %vm329, %v800, 0.0
    %805 = vadd.xlane.f32.xlu0 %v804
    %v806 = vpop.xlane.xlu0 %805
    %v808 = vlaneseq
    %v809 = vshrl.u32 %v808, 7
    %v810 = vsub.s32 0, %v809
    %v811 = vrot.slane %v83, %v810
    %v813 = vmul.f32 %v811, %v793
    %vm814 = vcmask 27648
    %v815 = vsel %vm814, %v813, 0.0
    %816 = vadd.xlane.f32.xlu0 %v815
    %v817 = vpop.xlane.xlu0 %816
    %v818 = vsub.f32 1.0, %v803
    %v819 = vsub.f32 1.0, %v806
    %v820 = vmul.f32 %v818, %v84
    %v821 = vmul.f32 %v819, %v85
    %vm822 = vcmask 7168
    %v824 = vsel %vm822, %v803, 0
    %v827 = vsel %vm822, %v806, 0
    %vm829 = vcmask 1040384
    %v830 = vsel %vm829, %v236, 0
    %832 = vmatprep.subr.mxu0 0.0
    %833 = vmatpush1.msra.mxu0 %v830
    %834 = vmatprep.subr.mxu0 0.0
    %835 = vmatpush1.msra.mxu0 0.0
    %836 = vmatprep.subr.mxu0 0.0
    %837 = vmatpush1.msra.mxu0 0.0
    %838 = vmatprep.subr.mxu0 0.0
    %839 = vmatpush1.msra.mxu0 0.0
    %840 = vmatprep.subr.mxu0 0.0
    %841 = vmatpush1.msra.mxu0 0.0
    %842 = vmatprep.subr.mxu0 0.0
    %843 = vmatpush1.msra.mxu0 0.0
    %844 = vmatprep.subr.mxu0 0.0
    %845 = vmatpush1.msra.mxu0 0.0
    %846 = vmatprep.subr.mxu0 0.0
    %847 = vmatpush1.msra.mxu0 0.0
    %848 = vmatprep.subr.mxu0 0.0
    %849 = vmatpush1.msra.mxu0 0.0
    %850 = vmatprep.subr.mxu0 0.0
    %851 = vmatpush1.msra.mxu0 0.0
    %852 = vmatprep.subr.mxu0 0.0
    %853 = vmatpush1.msra.mxu0 0.0
    %854 = vmatprep.subr.mxu0 0.0
    %855 = vmatpush1.msra.mxu0 0.0
    %856 = vmatprep.subr.mxu0 0.0
    %857 = vmatpush1.msra.mxu0 0.0
    %858 = vmatprep.subr.mxu0 0.0
    %859 = vmatpush1.msra.mxu0 0.0
    %860 = vmatprep.subr.mxu0 0.0
    %861 = vmatpush1.msra.mxu0 0.0
    %862 = vmatprep.subr.mxu0 0.0
    %863 = vmatpush1.msra.mxu0 0.0
    %864 = vmatprep.subr.mxu0 0.0
    %865 = vmatpush1.msra.mxu0 0.0
    %866 = vmatprep.subr.mxu0 0.0
    %867 = vmatpush1.msra.mxu0 0.0
    %868 = vmatprep.subr.mxu0 0.0
    %869 = vmatpush1.msra.mxu0 0.0
    %870 = vmatprep.subr.mxu0 0.0
    %871 = vmatpush1.msra.mxu0 0.0
    %872 = vmatprep.subr.mxu0 0.0
    %873 = vmatpush1.msra.mxu0 0.0
    %874 = vmatprep.subr.mxu0 0.0
    %875 = vmatpush1.msra.mxu0 0.0
    %876 = vmatprep.subr.mxu0 0.0
    %877 = vmatpush1.msra.mxu0 0.0
    %878 = vmatprep.subr.mxu0 0.0
    %879 = vmatpush1.msra.mxu0 0.0
    %880 = vmatprep.subr.mxu0 0.0
    %881 = vmatpush1.msra.mxu0 0.0
    %882 = vmatprep.subr.mxu0 0.0
    %883 = vmatpush1.msra.mxu0 0.0
    %884 = vmatprep.subr.mxu0 0.0
    %885 = vmatpush1.msra.mxu0 0.0
    %886 = vmatprep.subr.mxu0 0.0
    %887 = vmatpush1.msra.mxu0 0.0
    %888 = vmatprep.subr.mxu0 0.0
    %889 = vmatpush1.msra.mxu0 0.0
    %890 = vmatprep.subr.mxu0 0.0
    %891 = vmatpush1.msra.mxu0 0.0
    %892 = vmatprep.subr.mxu0 0.0
    %893 = vmatpush1.msra.mxu0 0.0
    %894 = vmatprep.subr.mxu0 0.0
    %895 = vmatpush1.msra.mxu0 0.0
    %896 = vmatprep.mubr.f32.mxu0 0.0
    %897 = vmatmul.mubr.f32.gmra.mrb[0].mxu0 %v824
    %v898 = vpop.f32.mrb[0].mxu0
    %v899 = vadd.f32 %v820, %v898
    %v900 = vpop.f32.mrb[0].mxu0
    %901 = vmatprep.mubr.f32.mxu0 0.0
    %902 = vmatmul.mubr.f32.gmra.mrb[0].mxu0 %v827
    %v903 = vpop.f32.mrb[0].mxu0
    %v904 = vadd.f32 %v821, %v903
    %v905 = vpop.f32.mrb[0].mxu0
    %906 = vdwg.mxu0
    %v907 = vsub.f32 1.0, %v80
    %v909 = vlaneseq
    %v910 = vshrl.u32 %v909, 7
    %v911 = vsub.s32 0, %v910
    %v912 = vrot.slane %v907, %v911
    %913 = vset.pattern.permute.xlu0 9
    %914 = vperm.xlu0 %913, %v912
    %v915 = vpop.permute.xlu0 %914
    %v917 = vmul.f32 %v84, %v915
    %v918 = vmul.f32 %v85, %v915
    %v919 = vlaneseq
    %v920 = vshrl.u32 %v919, 7
    %v921 = vsub.s32 0, %v920
    %v922 = vrot.slane %v80, %v921
    %923 = vset.pattern.permute.xlu0 9
    %924 = vperm.xlu0 %923, %v922
    %v925 = vpop.permute.xlu0 %924
    %v927 = vmul.f32 %v925, %v899
    %v928 = vmul.f32 %v925, %v904
    %v929 = vadd.f32 %v917, %v927
    %v930 = vadd.f32 %v918, %v928
    %v931 = vsub.f32 1.0, %v817
    %v932 = vmul.f32 %v931, %v86
    %v934 = vsel %vm822, %v817, 0
    %v937 = vsel %vm829, %v783, 0
    %939 = vmatprep.subr.mxu0 0.0
    %940 = vmatpush1.msra.mxu0 %v937
    %941 = vmatprep.subr.mxu0 0.0
    %942 = vmatpush1.msra.mxu0 0.0
    %943 = vmatprep.subr.mxu0 0.0
    %944 = vmatpush1.msra.mxu0 0.0
    %945 = vmatprep.subr.mxu0 0.0
    %946 = vmatpush1.msra.mxu0 0.0
    %947 = vmatprep.subr.mxu0 0.0
    %948 = vmatpush1.msra.mxu0 0.0
    %949 = vmatprep.subr.mxu0 0.0
    %950 = vmatpush1.msra.mxu0 0.0
    %951 = vmatprep.subr.mxu0 0.0
    %952 = vmatpush1.msra.mxu0 0.0
    %953 = vmatprep.subr.mxu0 0.0
    %954 = vmatpush1.msra.mxu0 0.0
    %955 = vmatprep.subr.mxu0 0.0
    %956 = vmatpush1.msra.mxu0 0.0
    %957 = vmatprep.subr.mxu0 0.0
    %958 = vmatpush1.msra.mxu0 0.0
    %959 = vmatprep.subr.mxu0 0.0
    %960 = vmatpush1.msra.mxu0 0.0
    %961 = vmatprep.subr.mxu0 0.0
    %962 = vmatpush1.msra.mxu0 0.0
    %963 = vmatprep.subr.mxu0 0.0
    %964 = vmatpush1.msra.mxu0 0.0
    %965 = vmatprep.subr.mxu0 0.0
    %966 = vmatpush1.msra.mxu0 0.0
    %967 = vmatprep.subr.mxu0 0.0
    %968 = vmatpush1.msra.mxu0 0.0
    %969 = vmatprep.subr.mxu0 0.0
    %970 = vmatpush1.msra.mxu0 0.0
    %971 = vmatprep.subr.mxu0 0.0
    %972 = vmatpush1.msra.mxu0 0.0
    %973 = vmatprep.subr.mxu0 0.0
    %974 = vmatpush1.msra.mxu0 0.0
    %975 = vmatprep.subr.mxu0 0.0
    %976 = vmatpush1.msra.mxu0 0.0
    %977 = vmatprep.subr.mxu0 0.0
    %978 = vmatpush1.msra.mxu0 0.0
    %979 = vmatprep.subr.mxu0 0.0
    %980 = vmatpush1.msra.mxu0 0.0
    %981 = vmatprep.subr.mxu0 0.0
    %982 = vmatpush1.msra.mxu0 0.0
    %983 = vmatprep.subr.mxu0 0.0
    %984 = vmatpush1.msra.mxu0 0.0
    %985 = vmatprep.subr.mxu0 0.0
    %986 = vmatpush1.msra.mxu0 0.0
    %987 = vmatprep.subr.mxu0 0.0
    %988 = vmatpush1.msra.mxu0 0.0
    %989 = vmatprep.subr.mxu0 0.0
    %990 = vmatpush1.msra.mxu0 0.0
    %991 = vmatprep.subr.mxu0 0.0
    %992 = vmatpush1.msra.mxu0 0.0
    %993 = vmatprep.subr.mxu0 0.0
    %994 = vmatpush1.msra.mxu0 0.0
    %995 = vmatprep.subr.mxu0 0.0
    %996 = vmatpush1.msra.mxu0 0.0
    %997 = vmatprep.subr.mxu0 0.0
    %998 = vmatpush1.msra.mxu0 0.0
    %999 = vmatprep.subr.mxu0 0.0
    %1000 = vmatpush1.msra.mxu0 0.0
    %1001 = vmatprep.subr.mxu0 0.0
    %1002 = vmatpush1.msra.mxu0 0.0
    %1003 = vmatprep.mubr.f32.mxu0 0.0
    %1004 = vmatmul.mubr.f32.gmra.mrb[0].mxu0 %v934
    %v1005 = vpop.f32.mrb[0].mxu0
    %v1006 = vadd.f32 0.0, %v1005
    %v1007 = vpop.f32.mrb[0].mxu0
    %1008 = vdwg.mxu0
    %v1009 = vadd.f32 %v932, %v1006
    %v1011 = vunpack.c.l.s4 1966171168
    %v1012 = vunpack.c.0.s8 %v1011
    %v1013 = vlaneseq
    %v1014 = vshrl.u32 %v1013, 7
    %v1015 = vsub.s32 %v1012, %v1014
    %v1016 = vrot.slane %v163, %v1015
    %v1018 = vunpack.c.l.s4 1966171168
    %v1019 = vunpack.c.0.s8 %v1018
    %v1020 = vlaneseq
    %v1021 = vshrl.u32 %v1020, 7
    %v1022 = vsub.s32 %v1019, %v1021
    %v1023 = vrot.slane %v1016, %v1022
    %1024 = vrot.lane.b32.xlu0 %v1023, 10
    %v1025 = vpop.permute.xlu0 %1024
    %v1027 = vmul.f32 %v80, %v1025
    %v1028 = vld [vmem:[%s12] sm:$0xff]
    %v1029 = vld [vmem:[%s12 + $0x8] sm:$0xff]
    %v1031 = vsel %vm329, %v87, 0
    %1033 = vmatprep.subr.mxu0 0.0
    %1034 = vmatpush1.msra.mxu0 %v1028
    %1035 = vmatprep.subr.mxu0 0.0
    %1036 = vmatpush1.msra.mxu0 %v1029
    %1037 = vmatprep.subr.mxu0 0.0
    %1038 = vmatpush1.msra.mxu0 0.0
    %1039 = vmatprep.subr.mxu0 0.0
    %1040 = vmatpush1.msra.mxu0 0.0
    %1041 = vmatprep.subr.mxu0 0.0
    %1042 = vmatpush1.msra.mxu0 0.0
    %1043 = vmatprep.subr.mxu0 0.0
    %1044 = vmatpush1.msra.mxu0 0.0
    %1045 = vmatprep.subr.mxu0 0.0
    %1046 = vmatpush1.msra.mxu0 0.0
    %1047 = vmatprep.subr.mxu0 0.0
    %1048 = vmatpush1.msra.mxu0 0.0
    %1049 = vmatprep.subr.mxu0 0.0
    %1050 = vmatpush1.msra.mxu0 0.0
    %1051 = vmatprep.subr.mxu0 0.0
    %1052 = vmatpush1.msra.mxu0 0.0
    %1053 = vmatprep.subr.mxu0 0.0
    %1054 = vmatpush1.msra.mxu0 0.0
    %1055 = vmatprep.subr.mxu0 0.0
    %1056 = vmatpush1.msra.mxu0 0.0
    %1057 = vmatprep.subr.mxu0 0.0
    %1058 = vmatpush1.msra.mxu0 0.0
    %1059 = vmatprep.subr.mxu0 0.0
    %1060 = vmatpush1.msra.mxu0 0.0
    %1061 = vmatprep.subr.mxu0 0.0
    %1062 = vmatpush1.msra.mxu0 0.0
    %1063 = vmatprep.subr.mxu0 0.0
    %1064 = vmatpush1.msra.mxu0 0.0
    %1065 = vmatprep.subr.mxu0 0.0
    %1066 = vmatpush1.msra.mxu0 0.0
    %1067 = vmatprep.subr.mxu0 0.0
    %1068 = vmatpush1.msra.mxu0 0.0
    %1069 = vmatprep.subr.mxu0 0.0
    %1070 = vmatpush1.msra.mxu0 0.0
    %1071 = vmatprep.subr.mxu0 0.0
    %1072 = vmatpush1.msra.mxu0 0.0
    %1073 = vmatprep.subr.mxu0 0.0
    %1074 = vmatpush1.msra.mxu0 0.0
    %1075 = vmatprep.subr.mxu0 0.0
    %1076 = vmatpush1.msra.mxu0 0.0
    %1077 = vmatprep.subr.mxu0 0.0
    %1078 = vmatpush1.msra.mxu0 0.0
    %1079 = vmatprep.subr.mxu0 0.0
    %1080 = vmatpush1.msra.mxu0 0.0
    %1081 = vmatprep.subr.mxu0 0.0
    %1082 = vmatpush1.msra.mxu0 0.0
    %1083 = vmatprep.subr.mxu0 0.0
    %1084 = vmatpush1.msra.mxu0 0.0
    %1085 = vmatprep.subr.mxu0 0.0
    %1086 = vmatpush1.msra.mxu0 0.0
    %1087 = vmatprep.subr.mxu0 0.0
    %1088 = vmatpush1.msra.mxu0 0.0
    %1089 = vmatprep.subr.mxu0 0.0
    %1090 = vmatpush1.msra.mxu0 0.0
    %1091 = vmatprep.subr.mxu0 0.0
    %1092 = vmatpush1.msra.mxu0 0.0
    %1093 = vmatprep.subr.mxu0 0.0
    %1094 = vmatpush1.msra.mxu0 0.0
    %1095 = vmatprep.subr.mxu0 0.0
    %1096 = vmatpush1.msra.mxu0 0.0
    %1097 = vmatprep.mubr.f32.mxu0 0.0
    %1098 = vmatmul.mubr.f32.gmra.mrb[0].mxu0 %v1031
    %v1099 = vpop.f32.mrb[0].mxu0
    %v1100 = vadd.f32 0.0, %v1099
    %v1101 = vpop.f32.mrb[0].mxu0
    %1102 = vdwg.mxu0
    %v1103 = vsub.f32 1.0, %v1027
    %1105 = vset.pattern.permute.xlu0 10
    %1106 = vperm.xlu0 %1105, %v1103
    %v1107 = vpop.permute.xlu0 %1106
    %v1109 = vlaneseq
    %v1110 = vshrl.u32 %v1109, 7
    %v1111 = vsub.s32 0, %v1110
    %v1112 = vrot.slane %v1107, %v1111
    %v1113 = vmul.f32 %v1100, %v1112
    %1115 = vset.pattern.permute.xlu0 10
    %1116 = vperm.xlu0 %1115, %v1027
    %v1117 = vpop.permute.xlu0 %1116
    %v1119 = vlaneseq
    %v1120 = vshrl.u32 %v1119, 7
    %v1121 = vsub.s32 0, %v1120
    %v1122 = vrot.slane %v1117, %v1121
    %v1123 = vmul.f32 %v236, %v1122
    %v1124 = vadd.f32 %v1113, %v1123
    %1125 = vst.msk [vmem:[#allocation2] sm:$0xff] %vm329, %v929
    %1126 = vst.msk [vmem:[#allocation2 + $0x8] sm:$0xff] %vm329, %v930
    %vm1127 = vcmask 125952
    %1128 = vst.msk [vmem:[#allocation3] sm:$0xf] %vm1127, %v1009
    %vm1129 = vcmask 122880
    %1130 = vst.msk [vmem:[#allocation4] sm:$0x1] %vm1129, %v1124
    %vm1131 = vcmask 0
    %1132 = vst.msk [vmem:[#allocation12] sm:$0x1] %vm1131, %v80
    // Predicated region
    $region62: #{tpu_custom_call.1} parent=1 // pred_check
      %p1133 = pneg %p65
    $region63: #{tpu_custom_call.1} parent=1 // pred_check_branch
      %1135 = sbr.rel (%p1133) target = $region65
    $region64: #{tpu_custom_call.1} parent=1 // pred_region
      %1136 = vst.msk [vmem:[#allocation8] sm:$0xff] %vm329, %v929
      %1137 = vst.msk [vmem:[#allocation8 + $0x8] sm:$0xff] %vm329, %v930
      %1138 = vst.msk [vmem:[#allocation9] sm:$0xf] %vm1127, %v1009
      %1139 = vst.msk [vmem:[#allocation11] sm:$0x1] %vm1129, %v1124
    $region65: #{tpu_custom_call.1} parent=1 // pred_fallthru
      _
    // Predicated region
    $region66: #{tpu_custom_call.1} parent=1 // pred_check
      _
    $region67: #{tpu_custom_call.1} parent=1 // pred_check_branch
      %1141 = sbr.rel (0) target = $region69
    $region68: #{tpu_custom_call.1} parent=1 // pred_region
      %s1143 = ssub.s32 256, 256
      %1144 = vsyncadd [#allocation7], %s1143
      %s1145 = sshll.u32 [#allocation8], 4
      %s1146 = int_to_ptr.vmem [resolvable:$true] %s1145
      %1151 = dma.vmem_to_hbm [thread:$0]  %s1146, 256, %s13, [#allocation7], 128, 128, 8
    $region69: #{tpu_custom_call.1} parent=1 // pred_fallthru
      _
    // Predicated region
    $region70: #{tpu_custom_call.1} parent=1 // pred_check
      _
    $region71: #{tpu_custom_call.1} parent=1 // pred_check_branch
      %1153 = sbr.rel (0) target = $region73
    $region72: #{tpu_custom_call.1} parent=1 // pred_region
      %s1155 = ssub.s32 64, 64
      %1156 = vsyncadd [#allocation10], %s1155
      %s1158 = sshll.u32 [#allocation9], 4
      %s1159 = int_to_ptr.vmem [resolvable:$true] %s1158
      %1161 = dma.vmem_to_hbm [thread:$0]  %s1159, 64, %s14, [#allocation10]
    $region73: #{tpu_custom_call.1} parent=1 // pred_fallthru
      _
    // Predicated region
    $region74: #{tpu_custom_call.1} parent=1 // pred_check
      _
    $region75: #{tpu_custom_call.1} parent=1 // pred_check_branch
      %1163 = sbr.rel (0) target = $region77
    $region76: #{tpu_custom_call.1} parent=1 // pred_region
      %s1165 = ssub.s32 16, 16
      %1166 = vsyncadd [#allocation10], %s1165
      %s1168 = sshll.u32 [#allocation11], 4
      %s1169 = int_to_ptr.vmem [resolvable:$true] %s1168
      %1171 = dma.vmem_to_hbm [thread:$0]  %s1169, 16, %s15, [#allocation10]
    $region77: #{tpu_custom_call.1} parent=1 // pred_fallthru
      _
    // Predicated region
    $region78: #{tpu_custom_call.1} parent=1 // pred_check
      _
    $region79: #{tpu_custom_call.1} parent=1 // pred_check_branch
      %1173 = sbr.rel (0) target = $region81
    $region80: #{tpu_custom_call.1} parent=1 // pred_region
      %s1175 = ssub.s32 16, 16
      %1176 = vsyncadd [#allocation13], %s1175
      %s1178 = sshll.u32 [#allocation12], 4
      %s1179 = int_to_ptr.vmem [resolvable:$true] %s1178
      %1181 = dma.vmem_to_hbm [thread:$0]  %s1179, 16, %s16, [#allocation13]
    $region81: #{tpu_custom_call.1} parent=1 // pred_fallthru
      _
    // Predicated region
    $region82: #{tpu_custom_call.1} parent=1 // pred_check
      _
    $region83: #{tpu_custom_call.1} parent=1 // pred_check_branch
      %1183 = sbr.rel (0) target = $region85
    $region84: #{tpu_custom_call.1} parent=1 // pred_region
      %1184 = dma.done [#allocation7], 256
    $region85: #{tpu_custom_call.1} parent=1 // pred_fallthru
      _
    // Predicated region
    $region86: #{tpu_custom_call.1} parent=1 // pred_check
      _
    $region87: #{tpu_custom_call.1} parent=1 // pred_check_branch
      %1186 = sbr.rel (0) target = $region89
    $region88: #{tpu_custom_call.1} parent=1 // pred_region
      %1187 = dma.done [#allocation10], 64
    $region89: #{tpu_custom_call.1} parent=1 // pred_fallthru
      _
    // Predicated region
    $region90: #{tpu_custom_call.1} parent=1 // pred_check
      _
    $region91: #{tpu_custom_call.1} parent=1 // pred_check_branch
      %1189 = sbr.rel (0) target = $region93
    $region92: #{tpu_custom_call.1} parent=1 // pred_region
      %1190 = dma.done [#allocation10], 16
    $region93: #{tpu_custom_call.1} parent=1 // pred_fallthru
      _
    // Predicated region
    $region94: #{tpu_custom_call.1} parent=1 // pred_check
      _
    $region95: #{tpu_custom_call.1} parent=1 // pred_check_branch
      %1192 = sbr.rel (0) target = $region97
    $region96: #{tpu_custom_call.1} parent=1 // pred_region
      %1193 = dma.done [#allocation13], 16
    $region97: #{tpu_custom_call.1} parent=1 // pred_fallthru
      _
    %1194 = vsyncpa [#allocation6], 1
    %1195 = vsyncpa [#allocation7], 1
    %1196 = vsyncpa [#allocation10], 1
    %1197 = vsyncpa [#allocation13], 1

</llo_original>
